<compile_context>
chip_gen: v7x
topology: tpu7x:2x2x1
jax: 0.10.0
libtpu: 0.0.40
codegen_flags: <defaults>
</compile_context>

<pallas_src>
import functools

import jax
import jax.numpy as jnp
from jax.experimental import pallas as pl
from jax.experimental.pallas import tpu as pltpu

KSIZE = 7
PAD = 3  # padding = 3 for kernel_size = 7 (as in the PyTorch module)


def _round_up(a, b):
    return (a + b - 1) // b * b


def _pick_channel_chunk(C, L, itemsize, target_bytes):
    """Channel block sized by a VMEM byte budget (lane-padded), not a divisor."""
    per_channel = _round_up(L, 128) * itemsize
    cap = max(1, target_bytes // per_channel)
    if cap >= C or C <= 8:
        return C
    # The block's sublane dim must be a multiple of 8 (or the full C);
    # a non-divisible C gets a masked tail instead of a smaller chunk.
    return max(8, (cap // 8) * 8)


def _spatial_attention_kernel(x_ref, band_ref, o_ref, mflat_ref, mpad_ref,
                              *, C, tc, H, W, Wp):
    # x_ref:     (1, tc, L)          lane-dense channel chunk, L = H*W
    # band_ref:  (KSIZE, Wp, Wp)     banded per-row conv weights, bfloat16
    # o_ref:     (1, 1, H, W)        output tile (written on the last chunk)
    # mflat_ref: (1, L)        f32   running channel max, flat / lane-dense
    # mpad_ref:  (H+2*PAD, Wp) f32   zero-padded 2-D max map (epilogue only)
    c = pl.program_id(1)
    nc = pl.num_programs(1)
    L = H * W

    x_chunk = x_ref[0]                                      # (tc, L)
    if C % tc != 0:
        # Masked tail: the last block reads past C; kill the garbage channels.
        ch = jax.lax.broadcasted_iota(jnp.int32, (tc, L), 0)
        x_chunk = jnp.where(c * tc + ch < C, x_chunk,
                            jnp.asarray(-jnp.inf, x_chunk.dtype))
    chunk_max = jnp.max(x_chunk, axis=0, keepdims=True).astype(jnp.float32)

    @pl.when(c == 0)
    def _init():
        mflat_ref[...] = chunk_max                # full-width aligned store

    @pl.when(c > 0)
    def _update():
        mflat_ref[...] = jnp.maximum(mflat_ref[...], chunk_max)

    @pl.when(c == nc - 1)
    def _epilogue():
        # Fully zero the padded map (halo rows AND lane-padding columns).  The
        # banded weights have zero rows for x' >= W, but 0 * stale-VMEM NaN/Inf
        # would still poison the MXU accumulation, so nothing may stay
        # uninitialized.  Once per batch element -> negligible.
        mpad_ref[...] = jnp.zeros((H + 2 * PAD, Wp), jnp.float32)
        # Scatter the flat running max into 2-D rows (static loop, per batch).
        for y in range(H):
            mpad_ref[PAD + y:PAD + y + 1, 0:W] = \
                mflat_ref[0:1, y * W:(y + 1) * W]

        # 7x7 conv == sum over the 7 kernel rows of
        #   (sublane-shifted window) @ (banded weight matrix).
        # bf16 operands -> single-pass MXU; accumulation stays f32.
        acc = jnp.dot(mpad_ref[0:H, :].astype(jnp.bfloat16), band_ref[0],
                      preferred_element_type=jnp.float32)
        for dy in range(1, KSIZE):
            acc = acc + jnp.dot(mpad_ref[dy:dy + H, :].astype(jnp.bfloat16),
                                band_ref[dy],
                                preferred_element_type=jnp.float32)
        # Output is tiny (one (H, W) map per batch element); a direct (possibly
        # lane-masked) store beats a lane-dense store + extra crop pass.
        o_ref[0, 0] = jax.nn.sigmoid(acc[:, 0:W]).astype(o_ref.dtype)


def make_spatial_attention_bands(conv_weight, W):
    """Banded conv weights for width W: (window_dy @ bands[dy])[y, x]
       = sum_dx w[dy, dx] * m[y+dy-PAD, x+dx-PAD]  (zero outside [0, W)).
    Depends only on the tiny 7x7 weight and W -- hoist it out of hot loops."""
    Wp = _round_up(W, 128)
    w2d = conv_weight.reshape(KSIZE, KSIZE).astype(jnp.float32)
    r = jnp.arange(Wp)
    diff = r[:, None] - r[None, :] + PAD                    # x' - x + PAD
    valid = ((diff >= 0) & (diff < KSIZE)
             & (r[:, None] < W) & (r[None, :] < W))
    idx = jnp.clip(diff, 0, KSIZE - 1)
    bands = jnp.where(valid[None, :, :], w2d[:, idx], jnp.float32(0.0))
    return bands.astype(jnp.bfloat16)                       # (7, Wp, Wp)


def spatial_attention(x, conv_weight, *, bands=None,
                      channel_block_bytes=2 * 1024 * 1024):
    """x: (B, C, H, W); conv_weight: (1, 1, 7, 7). Returns sigmoid(conv(max_c(x)))."""
    B, C, H, W = x.shape
    L = H * W
    Wp = _round_up(W, 128)
    Lp = _round_up(L, 128)
    if bands is None:
        bands = make_spatial_attention_bands(conv_weight, W)

    tc = _pick_channel_chunk(C, L, x.dtype.itemsize, channel_block_bytes)
    num_chunks = -(-C // tc)

    # Streaming phase runs on a lane-dense (B, C, H*W) view: contiguous DMAs,
    # no 128-lane inflation of narrow W, aligned full-width max updates.
    x_flat = x.reshape(B, C, L)

    kernel = functools.partial(_spatial_attention_kernel,
                               C=C, tc=tc, H=H, W=W, Wp=Wp)

    # Explicit VMEM budget for the chosen tiling (v5e default scoped limit is
    # only 16 MiB; v7x physical VMEM is 64 MiB -> keep headroom).
    in_block = _round_up(tc, 8) * Lp * x.dtype.itemsize
    band_bytes = KSIZE * Wp * Wp * 2                        # bf16
    out_block = _round_up(H, 8) * Wp * x.dtype.itemsize
    scratch_bytes = (_round_up(H + 2 * PAD, 8) * Wp + 8 * Lp) * 4
    need = 2 * in_block + 2 * band_bytes + 2 * out_block + scratch_bytes
    vmem_limit = int(min(max(2 * need, 32 * 1024 * 1024), 48 * 1024 * 1024))

    # The banded weights are grid-invariant: a single VMEM buffer suffices.
    band_index_map = lambda b, c: (0, 0, 0)
    try:
        band_spec = pl.BlockSpec((KSIZE, Wp, Wp), band_index_map,
                                 pipeline_mode=pl.Buffered(1))
    except (TypeError, AttributeError):     # compatibility with older jax
        band_spec = pl.BlockSpec((KSIZE, Wp, Wp), band_index_map)

    return pl.pallas_call(
        kernel,
        out_shape=jax.ShapeDtypeStruct((B, 1, H, W), x.dtype),
        grid_spec=pltpu.PrefetchScalarGridSpec(
            num_scalar_prefetch=0,
            grid=(B, num_chunks),
            in_specs=[
                pl.BlockSpec((1, tc, L), lambda b, c: (b, c, 0)),
                band_spec,
            ],
            out_specs=pl.BlockSpec((1, 1, H, W), lambda b, c: (b, 0, 0, 0)),
            scratch_shapes=[
                pltpu.VMEM((1, L), jnp.float32),             # running max (flat)
                pltpu.VMEM((H + 2 * PAD, Wp), jnp.float32),  # padded max map
            ],
        ),
        compiler_params=pltpu.CompilerParams(
            dimension_semantics=("parallel", "arbitrary"),
            vmem_limit_bytes=vmem_limit,
        ),
    )(x_flat, bands)


def _reference(x, conv_weight):
    """Pure-JAX reference matching the PyTorch forward."""
    m = jnp.max(x, axis=1, keepdims=True)                   # (B,1,H,W)
    y = jax.lax.conv_general_dilated(
        m, conv_weight,
        window_strides=(1, 1),
        padding=((PAD, PAD), (PAD, PAD)),
        dimension_numbers=("NCHW", "OIHW", "NCHW"),
        precision=jax.lax.Precision.HIGHEST,
    )
    return jax.nn.sigmoid(y)


def _check(x, conv_weight, **kw):
    out = jax.block_until_ready(spatial_attention(x, conv_weight, **kw))
    ref = _reference(x, conv_weight)
    assert out.shape == ref.shape
    err = float(jnp.max(jnp.abs(out - ref)))
    # bf16 MXU operands (f32 accumulation) for a 49-tap conv feeding a
    # sigmoid gate: allow a few-1e-3 absolute tolerance.
    assert err < 5e-3, f"mismatch vs reference: max abs err = {err:.3e}"
    return err


if __name__ == "__main__":
    key = jax.random.PRNGKey(0)
    k_x, k_w, k_x2 = jax.random.split(key, 3)

    # PyTorch default Conv2d init: U(-1/sqrt(fan_in), 1/sqrt(fan_in)), fan_in=49.
    bound = 1.0 / (KSIZE * KSIZE) ** 0.5
    conv_weight = jax.random.uniform(
        k_w, (1, 1, KSIZE, KSIZE), minval=-bound, maxval=bound,
        dtype=jnp.float32)

    # Main check: B=2, C=4, H=W=16 (single channel chunk per batch element).
    x = jax.random.normal(k_x, (2, 4, 16, 16), dtype=jnp.float32)
    _check(x, conv_weight)

    # Multi-chunk + masked channel tail: a tiny per-step byte budget forces
    # tc=8 for C=12 -> 2 chunks, the second partially out-of-bounds / masked.
    x2 = jax.random.normal(k_x2, (1, 12, 8, 8), dtype=jnp.float32)
    _check(x2, conv_weight, channel_block_bytes=4096)

    print("KERNEL_OK")
</pallas_src>

<mosaic_0001>
module attributes {stable_mosaic.version = 11 : i64} {
  func.func @_spatial_attention_kernel(%arg0: i32, %arg1: i32, %arg2: memref<1x4x256xf32, #tpu.memory_space<vmem>>, %arg3: memref<7x128x128xbf16, #tpu.memory_space<vmem>>, %arg4: memref<1x1x16x16xf32, #tpu.memory_space<vmem>>, %arg5: memref<1x256xf32, #tpu.memory_space<vmem>>, %arg6: memref<22x128xf32, #tpu.memory_space<vmem>>) attributes {dimension_semantics = [#tpu.dimension_semantics<parallel>, #tpu.dimension_semantics<arbitrary>], iteration_bounds = array<i64: 2, 1>, scalar_prefetch = 0 : i64, scratch_operands = 2 : i64, tpu.core_type = #tpu.core_type<tc>, window_params = [{transform_indices = @transform_0, window_bounds = array<i64: 1, 4, 256>}, {pipeline_mode = #tpu.pipeline_mode<synchronous>, transform_indices = @transform_1, window_bounds = array<i64: 7, 128, 128>}, {transform_indices = @transform_2, window_bounds = array<i64: 1, 1, 16, 16>}]} {
    %c0 = arith.constant 0 : index
    %c0_0 = arith.constant 0 : index
    %c0_1 = arith.constant 0 : index
    %0 = vector.load %arg2[%c0, %c0_0, %c0_1] : memref<1x4x256xf32, #tpu.memory_space<vmem>>, vector<1x4x256xf32>
    %1 = vector.shape_cast %0 : vector<1x4x256xf32> to vector<4x256xf32>
    %cst = arith.constant dense<0xFF800000> : vector<256xf32>
    %2 = vector.multi_reduction <maximumf>, %1, %cst [0] : vector<4x256xf32> to vector<256xf32>
    %3 = vector.shape_cast %2 : vector<256xf32> to vector<1x256xf32>
    %c0_i32 = arith.constant 0 : i32
    %4 = arith.cmpi eq, %arg1, %c0_i32 : i32
    %5 = arith.extui %4 : i1 to i32
    %c0_i32_2 = arith.constant 0 : i32
    %6 = arith.cmpi ne, %5, %c0_i32_2 : i32
    scf.if %6 {
      %c0_7 = arith.constant 0 : index
      %c0_8 = arith.constant 0 : index
      %13 = vector.load %arg5[%c0_7, %c0_8] : memref<1x256xf32, #tpu.memory_space<vmem>>, vector<1x256xf32>
      tpu.vector_store %arg5[%c0_7, %c0_8], %3 {strides = array<i32>} : memref<1x256xf32, #tpu.memory_space<vmem>>, vector<1x256xf32>,
    } else {
    }
    %c0_i32_3 = arith.constant 0 : i32
    %7 = arith.cmpi sgt, %arg1, %c0_i32_3 : i32
    %8 = arith.extui %7 : i1 to i32
    %c0_i32_4 = arith.constant 0 : i32
    %9 = arith.cmpi ne, %8, %c0_i32_4 : i32
    scf.if %9 {
      %c0_7 = arith.constant 0 : index
      %c0_8 = arith.constant 0 : index
      %13 = vector.load %arg5[%c0_7, %c0_8] : memref<1x256xf32, #tpu.memory_space<vmem>>, vector<1x256xf32>
      %14 = arith.maximumf %13, %3 : vector<1x256xf32>
      %c0_9 = arith.constant 0 : index
      %c0_10 = arith.constant 0 : index
      %15 = vector.load %arg5[%c0_9, %c0_10] : memref<1x256xf32, #tpu.memory_space<vmem>>, vector<1x256xf32>
      tpu.vector_store %arg5[%c0_9, %c0_10], %14 {strides = array<i32>} : memref<1x256xf32, #tpu.memory_space<vmem>>, vector<1x256xf32>,
    } else {
    }
    %c0_i32_5 = arith.constant 0 : i32
    %10 = arith.cmpi eq, %arg1, %c0_i32_5 : i32
    %11 = arith.extui %10 : i1 to i32
    %c0_i32_6 = arith.constant 0 : i32
    %12 = arith.cmpi ne, %11, %c0_i32_6 : i32
    scf.if %12 {
      %cst_7 = arith.constant 0.000000e+00 : f32
      %13 = vector.broadcast %cst_7 : f32 to vector<22x128xf32>
      %c0_8 = arith.constant 0 : index
      %c0_9 = arith.constant 0 : index
      %14 = vector.load %arg6[%c0_8, %c0_9] : memref<22x128xf32, #tpu.memory_space<vmem>>, vector<22x128xf32>
      tpu.vector_store %arg6[%c0_8, %c0_9], %13 {strides = array<i32>} : memref<22x128xf32, #tpu.memory_space<vmem>>, vector<22x128xf32>,
      %c0_10 = arith.constant 0 : index
      %c0_11 = arith.constant 0 : index
      %15 = vector.load %arg5[%c0_10, %c0_11] : memref<1x256xf32, #tpu.memory_space<vmem>>, vector<1x16xf32>
      %c3 = arith.constant 3 : index
      %c0_12 = arith.constant 0 : index
      %16 = vector.load %arg6[%c3, %c0_12] : memref<22x128xf32, #tpu.memory_space<vmem>>, vector<1x16xf32>
      tpu.vector_store %arg6[%c3, %c0_12], %15 {strides = array<i32>} : memref<22x128xf32, #tpu.memory_space<vmem>>, vector<1x16xf32>,
      %c0_13 = arith.constant 0 : index
      %c16 = arith.constant 16 : index
      %17 = vector.load %arg5[%c0_13, %c16] : memref<1x256xf32, #tpu.memory_space<vmem>>, vector<1x16xf32>
      %c4 = arith.constant 4 : index
      %c0_14 = arith.constant 0 : index
      %18 = vector.load %arg6[%c4, %c0_14] : memref<22x128xf32, #tpu.memory_space<vmem>>, vector<1x16xf32>
      tpu.vector_store %arg6[%c4, %c0_14], %17 {strides = array<i32>} : memref<22x128xf32, #tpu.memory_space<vmem>>, vector<1x16xf32>,
      %c0_15 = arith.constant 0 : index
      %c32 = arith.constant 32 : index
      %19 = vector.load %arg5[%c0_15, %c32] : memref<1x256xf32, #tpu.memory_space<vmem>>, vector<1x16xf32>
      %c5 = arith.constant 5 : index
      %c0_16 = arith.constant 0 : index
      %20 = vector.load %arg6[%c5, %c0_16] : memref<22x128xf32, #tpu.memory_space<vmem>>, vector<1x16xf32>
      tpu.vector_store %arg6[%c5, %c0_16], %19 {strides = array<i32>} : memref<22x128xf32, #tpu.memory_space<vmem>>, vector<1x16xf32>,
      %c0_17 = arith.constant 0 : index
      %c48 = arith.constant 48 : index
      %21 = vector.load %arg5[%c0_17, %c48] : memref<1x256xf32, #tpu.memory_space<vmem>>, vector<1x16xf32>
      %c6 = arith.constant 6 : index
      %c0_18 = arith.constant 0 : index
      %22 = vector.load %arg6[%c6, %c0_18] : memref<22x128xf32, #tpu.memory_space<vmem>>, vector<1x16xf32>
      tpu.vector_store %arg6[%c6, %c0_18], %21 {strides = array<i32>} : memref<22x128xf32, #tpu.memory_space<vmem>>, vector<1x16xf32>,
      %c0_19 = arith.constant 0 : index
      %c64 = arith.constant 64 : index
      %23 = vector.load %arg5[%c0_19, %c64] : memref<1x256xf32, #tpu.memory_space<vmem>>, vector<1x16xf32>
      %c7 = arith.constant 7 : index
      %c0_20 = arith.constant 0 : index
      %24 = vector.load %arg6[%c7, %c0_20] : memref<22x128xf32, #tpu.memory_space<vmem>>, vector<1x16xf32>
      tpu.vector_store %arg6[%c7, %c0_20], %23 {strides = array<i32>} : memref<22x128xf32, #tpu.memory_space<vmem>>, vector<1x16xf32>,
      %c0_21 = arith.constant 0 : index
      %c80 = arith.constant 80 : index
      %25 = vector.load %arg5[%c0_21, %c80] : memref<1x256xf32, #tpu.memory_space<vmem>>, vector<1x16xf32>
      %c8 = arith.constant 8 : index
      %c0_22 = arith.constant 0 : index
      %26 = vector.load %arg6[%c8, %c0_22] : memref<22x128xf32, #tpu.memory_space<vmem>>, vector<1x16xf32>
      tpu.vector_store %arg6[%c8, %c0_22], %25 {strides = array<i32>} : memref<22x128xf32, #tpu.memory_space<vmem>>, vector<1x16xf32>,
      %c0_23 = arith.constant 0 : index
      %c96 = arith.constant 96 : index
      %27 = vector.load %arg5[%c0_23, %c96] : memref<1x256xf32, #tpu.memory_space<vmem>>, vector<1x16xf32>
      %c9 = arith.constant 9 : index
      %c0_24 = arith.constant 0 : index
      %28 = vector.load %arg6[%c9, %c0_24] : memref<22x128xf32, #tpu.memory_space<vmem>>, vector<1x16xf32>
      tpu.vector_store %arg6[%c9, %c0_24], %27 {strides = array<i32>} : memref<22x128xf32, #tpu.memory_space<vmem>>, vector<1x16xf32>,
      %c0_25 = arith.constant 0 : index
      %c112 = arith.constant 112 : index
      %29 = vector.load %arg5[%c0_25, %c112] : memref<1x256xf32, #tpu.memory_space<vmem>>, vector<1x16xf32>
      %c10 = arith.constant 10 : index
      %c0_26 = arith.constant 0 : index
      %30 = vector.load %arg6[%c10, %c0_26] : memref<22x128xf32, #tpu.memory_space<vmem>>, vector<1x16xf32>
      tpu.vector_store %arg6[%c10, %c0_26], %29 {strides = array<i32>} : memref<22x128xf32, #tpu.memory_space<vmem>>, vector<1x16xf32>,
      %c0_27 = arith.constant 0 : index
      %c128 = arith.constant 128 : index
      %31 = vector.load %arg5[%c0_27, %c128] : memref<1x256xf32, #tpu.memory_space<vmem>>, vector<1x16xf32>
      %c11 = arith.constant 11 : index
      %c0_28 = arith.constant 0 : index
      %32 = vector.load %arg6[%c11, %c0_28] : memref<22x128xf32, #tpu.memory_space<vmem>>, vector<1x16xf32>
      tpu.vector_store %arg6[%c11, %c0_28], %31 {strides = array<i32>} : memref<22x128xf32, #tpu.memory_space<vmem>>, vector<1x16xf32>,
      %c0_29 = arith.constant 0 : index
      %c144 = arith.constant 144 : index
      %33 = vector.load %arg5[%c0_29, %c144] : memref<1x256xf32, #tpu.memory_space<vmem>>, vector<1x16xf32>
      %c12 = arith.constant 12 : index
      %c0_30 = arith.constant 0 : index
      %34 = vector.load %arg6[%c12, %c0_30] : memref<22x128xf32, #tpu.memory_space<vmem>>, vector<1x16xf32>
      tpu.vector_store %arg6[%c12, %c0_30], %33 {strides = array<i32>} : memref<22x128xf32, #tpu.memory_space<vmem>>, vector<1x16xf32>,
      %c0_31 = arith.constant 0 : index
      %c160 = arith.constant 160 : index
      %35 = vector.load %arg5[%c0_31, %c160] : memref<1x256xf32, #tpu.memory_space<vmem>>, vector<1x16xf32>
      %c13 = arith.constant 13 : index
      %c0_32 = arith.constant 0 : index
      %36 = vector.load %arg6[%c13, %c0_32] : memref<22x128xf32, #tpu.memory_space<vmem>>, vector<1x16xf32>
      tpu.vector_store %arg6[%c13, %c0_32], %35 {strides = array<i32>} : memref<22x128xf32, #tpu.memory_space<vmem>>, vector<1x16xf32>,
      %c0_33 = arith.constant 0 : index
      %c176 = arith.constant 176 : index
      %37 = vector.load %arg5[%c0_33, %c176] : memref<1x256xf32, #tpu.memory_space<vmem>>, vector<1x16xf32>
      %c14 = arith.constant 14 : index
      %c0_34 = arith.constant 0 : index
      %38 = vector.load %arg6[%c14, %c0_34] : memref<22x128xf32, #tpu.memory_space<vmem>>, vector<1x16xf32>
      tpu.vector_store %arg6[%c14, %c0_34], %37 {strides = array<i32>} : memref<22x128xf32, #tpu.memory_space<vmem>>, vector<1x16xf32>,
      %c0_35 = arith.constant 0 : index
      %c192 = arith.constant 192 : index
      %39 = vector.load %arg5[%c0_35, %c192] : memref<1x256xf32, #tpu.memory_space<vmem>>, vector<1x16xf32>
      %c15 = arith.constant 15 : index
      %c0_36 = arith.constant 0 : index
      %40 = vector.load %arg6[%c15, %c0_36] : memref<22x128xf32, #tpu.memory_space<vmem>>, vector<1x16xf32>
      tpu.vector_store %arg6[%c15, %c0_36], %39 {strides = array<i32>} : memref<22x128xf32, #tpu.memory_space<vmem>>, vector<1x16xf32>,
      %c0_37 = arith.constant 0 : index
      %c208 = arith.constant 208 : index
      %41 = vector.load %arg5[%c0_37, %c208] : memref<1x256xf32, #tpu.memory_space<vmem>>, vector<1x16xf32>
      %c16_38 = arith.constant 16 : index
      %c0_39 = arith.constant 0 : index
      %42 = vector.load %arg6[%c16_38, %c0_39] : memref<22x128xf32, #tpu.memory_space<vmem>>, vector<1x16xf32>
      tpu.vector_store %arg6[%c16_38, %c0_39], %41 {strides = array<i32>} : memref<22x128xf32, #tpu.memory_space<vmem>>, vector<1x16xf32>,
      %c0_40 = arith.constant 0 : index
      %c224 = arith.constant 224 : index
      %43 = vector.load %arg5[%c0_40, %c224] : memref<1x256xf32, #tpu.memory_space<vmem>>, vector<1x16xf32>
      %c17 = arith.constant 17 : index
      %c0_41 = arith.constant 0 : index
      %44 = vector.load %arg6[%c17, %c0_41] : memref<22x128xf32, #tpu.memory_space<vmem>>, vector<1x16xf32>
      tpu.vector_store %arg6[%c17, %c0_41], %43 {strides = array<i32>} : memref<22x128xf32, #tpu.memory_space<vmem>>, vector<1x16xf32>,
      %c0_42 = arith.constant 0 : index
      %c240 = arith.constant 240 : index
      %45 = vector.load %arg5[%c0_42, %c240] : memref<1x256xf32, #tpu.memory_space<vmem>>, vector<1x16xf32>
      %c18 = arith.constant 18 : index
      %c0_43 = arith.constant 0 : index
      %46 = vector.load %arg6[%c18, %c0_43] : memref<22x128xf32, #tpu.memory_space<vmem>>, vector<1x16xf32>
      tpu.vector_store %arg6[%c18, %c0_43], %45 {strides = array<i32>} : memref<22x128xf32, #tpu.memory_space<vmem>>, vector<1x16xf32>,
      %c0_44 = arith.constant 0 : index
      %c0_45 = arith.constant 0 : index
      %47 = vector.load %arg6[%c0_44, %c0_45] : memref<22x128xf32, #tpu.memory_space<vmem>>, vector<16x128xf32>
      %48 = arith.truncf %47 : vector<16x128xf32> to vector<16x128xbf16>
      %c0_46 = arith.constant 0 : index
      %c0_47 = arith.constant 0 : index
      %c0_48 = arith.constant 0 : index
      %49 = vector.load %arg3[%c0_46, %c0_47, %c0_48] : memref<7x128x128xbf16, #tpu.memory_space<vmem>>, vector<1x128x128xbf16>
      %50 = vector.shape_cast %49 : vector<1x128x128xbf16> to vector<128x128xbf16>
      %cst_49 = arith.constant dense<0.000000e+00> : vector<16x128xf32>
      %51 = tpu.matmul %48, %50, %cst_49 {dimension_numbers = #tpu.dot_dimension_numbers<[1], [0], [0], [1], [0, 0, 1, 1], [], []>} : vector<16x128xbf16>, vector<128x128xbf16>, vector<16x128xf32> -> vector<16x128xf32>
      %c1 = arith.constant 1 : index
      %c0_50 = arith.constant 0 : index
      %52 = vector.load %arg6[%c1, %c0_50] : memref<22x128xf32, #tpu.memory_space<vmem>>, vector<16x128xf32>
      %53 = arith.truncf %52 : vector<16x128xf32> to vector<16x128xbf16>
      %c1_51 = arith.constant 1 : index
      %c0_52 = arith.constant 0 : index
      %c0_53 = arith.constant 0 : index
      %54 = vector.load %arg3[%c1_51, %c0_52, %c0_53] : memref<7x128x128xbf16, #tpu.memory_space<vmem>>, vector<1x128x128xbf16>
      %55 = vector.shape_cast %54 : vector<1x128x128xbf16> to vector<128x128xbf16>
      %cst_54 = arith.constant dense<0.000000e+00> : vector<16x128xf32>
      %56 = tpu.matmul %53, %55, %cst_54 {dimension_numbers = #tpu.dot_dimension_numbers<[1], [0], [0], [1], [0, 0, 1, 1], [], []>} : vector<16x128xbf16>, vector<128x128xbf16>, vector<16x128xf32> -> vector<16x128xf32>
      %57 = arith.addf %51, %56 : vector<16x128xf32>
      %c2 = arith.constant 2 : index
      %c0_55 = arith.constant 0 : index
      %58 = vector.load %arg6[%c2, %c0_55] : memref<22x128xf32, #tpu.memory_space<vmem>>, vector<16x128xf32>
      %59 = arith.truncf %58 : vector<16x128xf32> to vector<16x128xbf16>
      %c2_56 = arith.constant 2 : index
      %c0_57 = arith.constant 0 : index
      %c0_58 = arith.constant 0 : index
      %60 = vector.load %arg3[%c2_56, %c0_57, %c0_58] : memref<7x128x128xbf16, #tpu.memory_space<vmem>>, vector<1x128x128xbf16>
      %61 = vector.shape_cast %60 : vector<1x128x128xbf16> to vector<128x128xbf16>
      %cst_59 = arith.constant dense<0.000000e+00> : vector<16x128xf32>
      %62 = tpu.matmul %59, %61, %cst_59 {dimension_numbers = #tpu.dot_dimension_numbers<[1], [0], [0], [1], [0, 0, 1, 1], [], []>} : vector<16x128xbf16>, vector<128x128xbf16>, vector<16x128xf32> -> vector<16x128xf32>
      %63 = arith.addf %57, %62 : vector<16x128xf32>
      %c3_60 = arith.constant 3 : index
      %c0_61 = arith.constant 0 : index
      %64 = vector.load %arg6[%c3_60, %c0_61] : memref<22x128xf32, #tpu.memory_space<vmem>>, vector<16x128xf32>
      %65 = arith.truncf %64 : vector<16x128xf32> to vector<16x128xbf16>
      %c3_62 = arith.constant 3 : index
      %c0_63 = arith.constant 0 : index
      %c0_64 = arith.constant 0 : index
      %66 = vector.load %arg3[%c3_62, %c0_63, %c0_64] : memref<7x128x128xbf16, #tpu.memory_space<vmem>>, vector<1x128x128xbf16>
      %67 = vector.shape_cast %66 : vector<1x128x128xbf16> to vector<128x128xbf16>
      %cst_65 = arith.constant dense<0.000000e+00> : vector<16x128xf32>
      %68 = tpu.matmul %65, %67, %cst_65 {dimension_numbers = #tpu.dot_dimension_numbers<[1], [0], [0], [1], [0, 0, 1, 1], [], []>} : vector<16x128xbf16>, vector<128x128xbf16>, vector<16x128xf32> -> vector<16x128xf32>
      %69 = arith.addf %63, %68 : vector<16x128xf32>
      %c4_66 = arith.constant 4 : index
      %c0_67 = arith.constant 0 : index
      %70 = vector.load %arg6[%c4_66, %c0_67] : memref<22x128xf32, #tpu.memory_space<vmem>>, vector<16x128xf32>
      %71 = arith.truncf %70 : vector<16x128xf32> to vector<16x128xbf16>
      %c4_68 = arith.constant 4 : index
      %c0_69 = arith.constant 0 : index
      %c0_70 = arith.constant 0 : index
      %72 = vector.load %arg3[%c4_68, %c0_69, %c0_70] : memref<7x128x128xbf16, #tpu.memory_space<vmem>>, vector<1x128x128xbf16>
      %73 = vector.shape_cast %72 : vector<1x128x128xbf16> to vector<128x128xbf16>
      %cst_71 = arith.constant dense<0.000000e+00> : vector<16x128xf32>
      %74 = tpu.matmul %71, %73, %cst_71 {dimension_numbers = #tpu.dot_dimension_numbers<[1], [0], [0], [1], [0, 0, 1, 1], [], []>} : vector<16x128xbf16>, vector<128x128xbf16>, vector<16x128xf32> -> vector<16x128xf32>
      %75 = arith.addf %69, %74 : vector<16x128xf32>
      %c5_72 = arith.constant 5 : index
      %c0_73 = arith.constant 0 : index
      %76 = vector.load %arg6[%c5_72, %c0_73] : memref<22x128xf32, #tpu.memory_space<vmem>>, vector<16x128xf32>
      %77 = arith.truncf %76 : vector<16x128xf32> to vector<16x128xbf16>
      %c5_74 = arith.constant 5 : index
      %c0_75 = arith.constant 0 : index
      %c0_76 = arith.constant 0 : index
      %78 = vector.load %arg3[%c5_74, %c0_75, %c0_76] : memref<7x128x128xbf16, #tpu.memory_space<vmem>>, vector<1x128x128xbf16>
      %79 = vector.shape_cast %78 : vector<1x128x128xbf16> to vector<128x128xbf16>
      %cst_77 = arith.constant dense<0.000000e+00> : vector<16x128xf32>
      %80 = tpu.matmul %77, %79, %cst_77 {dimension_numbers = #tpu.dot_dimension_numbers<[1], [0], [0], [1], [0, 0, 1, 1], [], []>} : vector<16x128xbf16>, vector<128x128xbf16>, vector<16x128xf32> -> vector<16x128xf32>
      %81 = arith.addf %75, %80 : vector<16x128xf32>
      %c6_78 = arith.constant 6 : index
      %c0_79 = arith.constant 0 : index
      %82 = vector.load %arg6[%c6_78, %c0_79] : memref<22x128xf32, #tpu.memory_space<vmem>>, vector<16x128xf32>
      %83 = arith.truncf %82 : vector<16x128xf32> to vector<16x128xbf16>
      %c6_80 = arith.constant 6 : index
      %c0_81 = arith.constant 0 : index
      %c0_82 = arith.constant 0 : index
      %84 = vector.load %arg3[%c6_80, %c0_81, %c0_82] : memref<7x128x128xbf16, #tpu.memory_space<vmem>>, vector<1x128x128xbf16>
      %85 = vector.shape_cast %84 : vector<1x128x128xbf16> to vector<128x128xbf16>
      %cst_83 = arith.constant dense<0.000000e+00> : vector<16x128xf32>
      %86 = tpu.matmul %83, %85, %cst_83 {dimension_numbers = #tpu.dot_dimension_numbers<[1], [0], [0], [1], [0, 0, 1, 1], [], []>} : vector<16x128xbf16>, vector<128x128xbf16>, vector<16x128xf32> -> vector<16x128xf32>
      %87 = arith.addf %81, %86 : vector<16x128xf32>
      %88 = vector.extract_strided_slice %87 {offsets = [0, 0], sizes = [16, 16], strides = [1, 1]} : vector<16x128xf32> to vector<16x16xf32>
      %89 = arith.negf %88 : vector<16x16xf32>
      %90 = math.exp %89 : vector<16x16xf32>
      %cst_84 = arith.constant 1.000000e+00 : f32
      %91 = vector.broadcast %cst_84 : f32 to vector<16x16xf32>
      %92 = arith.addf %91, %90 : vector<16x16xf32>
      %93 = arith.divf %91, %92 : vector<16x16xf32>
      %c0_85 = arith.constant 0 : index
      %c0_86 = arith.constant 0 : index
      %c0_87 = arith.constant 0 : index
      %c0_88 = arith.constant 0 : index
      %94 = vector.load %arg4[%c0_85, %c0_86, %c0_87, %c0_88] : memref<1x1x16x16xf32, #tpu.memory_space<vmem>>, vector<1x1x16x16xf32>
      %95 = vector.shape_cast %94 : vector<1x1x16x16xf32> to vector<16x16xf32>
      %96 = vector.shape_cast %93 : vector<16x16xf32> to vector<1x1x16x16xf32>
      tpu.vector_store %arg4[%c0_85, %c0_86, %c0_87, %c0_88], %96 {strides = array<i32>} : memref<1x1x16x16xf32, #tpu.memory_space<vmem>>, vector<1x1x16x16xf32>,
    } else {
    }
    return
  }
  func.func @transform_0(%arg0: i32, %arg1: i32) -> (i32, i32, i32) {
    %c0_i32 = arith.constant 0 : i32
    %c0_i32_0 = arith.constant 0 : i32
    return %arg0, %arg1, %c0_i32 : i32, i32, i32
  }
  func.func @transform_1(%arg0: i32, %arg1: i32) -> (i32, i32, i32) {
    %c0_i32 = arith.constant 0 : i32
    %c0_i32_0 = arith.constant 0 : i32
    %c0_i32_1 = arith.constant 0 : i32
    %c0_i32_2 = arith.constant 0 : i32
    return %c0_i32, %c0_i32_0, %c0_i32_1 : i32, i32, i32
  }
  func.func @transform_2(%arg0: i32, %arg1: i32) -> (i32, i32, i32, i32) {
    %c0_i32 = arith.constant 0 : i32
    %c0_i32_0 = arith.constant 0 : i32
    %c0_i32_1 = arith.constant 0 : i32
    %c0_i32_2 = arith.constant 0 : i32
    return %arg0, %c0_i32, %c0_i32_0, %c0_i32_1 : i32, i32, i32, i32
  }
}

</mosaic_0001>

<llo_original>
// kernel: tpu_custom_call.1
$region0: #{tpu_custom_call.1}
  #allocation0 [shape = 'u32[]', space=smem, size = 0x4, offset = 0x4, fixed_abs, tag = 'smem constant byte address 0x4 - core index']
  #allocation1 [shape = 'u32[144,128]{1,0:T(1,128)}', space=vmem, size = 0x12000, scoped, tag = 'internal scratch']
  #allocation2 [shape = 'f32[1,256]{1,0:T(1,128)}', space=vmem, size = 0x400, scoped, tag = 'scratch operand']
  #allocation3 [shape = 'f32[22,128]{1,0:T(8,128)}', space=vmem, size = 0x3000, scoped, tag = 'scratch operand']
  %s0 = inlined_call_operand.hbm [shape: f32[2,4,256], index: 0, kind: input, shape index: {}]
  %s1 = inlined_call_operand.hbm [shape: bf16[7,128,128], index: 1, kind: input, shape index: {}]
  %s2 = inlined_call_operand.hbm [shape: f32[2,1,16,16], index: 2, kind: output, shape index: {}]
  %s3 = sld [smem:[#allocation0]]
  $region61: #{tpu_custom_call.1} parent=0
    _
  %s5 = ssub.s32 1, %s3
  %s6 = scalar_select 0, %s5, %s3
  $region1: #{tpu_custom_call.1} parent=0
    #allocation4 [shape = 'u8[8192]{0}', space=vmem, size = 0x2000, scoped, tag = 'input window, operand 0']
    #allocation5 [shape = 's32[2]{0}', space=sflag, size = 0x8, scoped, tag = 'scoped memory for tpu_custom_call.1']
    #allocation6 [shape = 's32[2]{0}', space=sflag, size = 0x8, scoped, tag = 'scoped memory for tpu_custom_call.1']
    #allocation7 [shape = 'u8[229376]{0}', space=vmem, size = 0x38000, scoped, tag = 'input window, operand 1, single buffered']
    #allocation8 [shape = 's32[1]{0}', space=sflag, size = 0x4, scoped, tag = 'scoped memory for tpu_custom_call.1']
    #allocation9 [shape = 'u8[16384]{0}', space=vmem, size = 0x4000, scoped, tag = 'output window, operand 0']
    %7 = vsyncpa [#allocation5], 0
    %s8 = scalar_lea.sflag [#allocation5], 1
    %9 = vsyncpa %s8, 0
    %10 = vsyncpa [#allocation8], 0
    %11 = vsyncpa [#allocation6], 0
    %s12 = scalar_lea.sflag [#allocation6], 1
    %13 = vsyncpa %s12, 0
    loop: start=0, step=1, limit=4
    $region2: #{tpu_custom_call.1} parent=1 // loop_pre_header
      _
    $region3: #{tpu_custom_call.1} parent=1 // loop_header
      %s15 = sphi 0, %s19
      %p16 = scmp.ge.s32.totalorder %s15, 4
      %s22 = sphi 0, %s34
      %s23 = sphi 0, %s30
      %s24 = sphi 0, %s22
      %s25 = sphi 0, %s23
      %s26 = sphi 0, %s24
      %s27 = sphi 0, %s25
      %s39 = sphi 0, %s41
      %s42 = sphi 0, %s39
      %s43 = sphi 0, %s42
      %s59 = sphi 0, %s43
      %s63 = sphi 0, %s63
      %s65 = sphi 0, %s63
      %s66 = sphi 0, %s65
      %s80 = sphi 0, %s66
      %s86 = sphi 0, %s88
      %s89 = sphi 0, %s86
      %s90 = sphi 0, %s89
      %s106 = sphi 0, %s90
    $region4: #{tpu_custom_call.1} parent=1 // loop_header_branch
      %18 = sbr.rel (%p16) target = $region8
    $region5: #{tpu_custom_call.1} parent=1 // loop_body
      %s20 = ssub.s32 %s15, 1
      %s21 = ssub.s32 %s15, 2
      %s28 = sadd.s32 1, %s23
      %p29 = scmp.ge.s32.totalorder %s28, 1
      %s30 = scalar_select %p29, 0, %s28
      %s31 = sadd.s32 1, %s22
      %s32 = scalar_select %p29, %s31, %s22
      %p33 = scmp.ge.s32.totalorder %s32, 2
      %s34 = scalar_select %p33, 0, %s32
      %s35 = ssub.s32 %s22, %s34
      %s36 = ssub.s32 %s23, %s30
      %s37 = sor.u32 %s35, %s36
      %p38 = scmp.eq.s32.totalorder %s37, 0
      %s40 = sadd.s32 %s39, 1
      %s41 = scalar_select %p38, %s39, %s40
      %p44 = pneg %p38
      %p45 = scmp.eq.s32.totalorder %s15, 1
      %p46 = por %p44, %p45
      %p47 = scmp.ne.s32.totalorder %s39, %s42
      %p48 = scmp.eq.s32.totalorder %s15, 0
      %p49 = por %p47, %p48
      %p50 = scmp.ne.s32.totalorder %s39, %s42
      %p51 = scmp.eq.s32.totalorder %s20, 1
      %p52 = por %p50, %p51
      %p53 = scmp.ne.s32.totalorder %s42, %s43
      %p54 = scmp.eq.s32.totalorder %s20, 0
      %p55 = por %p53, %p54
      %p56 = scmp.ne.s32.totalorder %s42, %s43
      %p57 = scmp.eq.s32.totalorder %s21, 1
      %p58 = por %p56, %p57
      %p60 = scmp.ne.s32.totalorder %s43, %s59
      %p61 = scmp.eq.s32.totalorder %s21, 0
      %p62 = por %p60, %p61
      %s64 = sadd.s32 %s63, 1
      %p67 = scmp.eq.s32.totalorder %s15, 1
      %p68 = scmp.ne.s32.totalorder %s63, %s65
      %p69 = scmp.eq.s32.totalorder %s15, 0
      %p70 = por %p68, %p69
      %p71 = scmp.ne.s32.totalorder %s63, %s65
      %p72 = scmp.eq.s32.totalorder %s20, 1
      %p73 = por %p71, %p72
      %p74 = scmp.ne.s32.totalorder %s65, %s66
      %p75 = scmp.eq.s32.totalorder %s20, 0
      %p76 = por %p74, %p75
      %p77 = scmp.ne.s32.totalorder %s65, %s66
      %p78 = scmp.eq.s32.totalorder %s21, 1
      %p79 = por %p77, %p78
      %p81 = scmp.ne.s32.totalorder %s66, %s80
      %p82 = scmp.eq.s32.totalorder %s21, 0
      %p83 = por %p81, %p82
      %s84 = ssub.s32 %s22, %s34
      %p85 = scmp.eq.s32.totalorder %s84, 0
      %s87 = sadd.s32 %s86, 1
      %s88 = scalar_select %p85, %s86, %s87
      %p91 = pneg %p85
      %p92 = scmp.eq.s32.totalorder %s15, 1
      %p93 = por %p91, %p92
      %p94 = scmp.ne.s32.totalorder %s86, %s89
      %p95 = scmp.eq.s32.totalorder %s15, 0
      %p96 = por %p94, %p95
      %p97 = scmp.ne.s32.totalorder %s86, %s89
      %p98 = scmp.eq.s32.totalorder %s20, 1
      %p99 = por %p97, %p98
      %p100 = scmp.ne.s32.totalorder %s89, %s90
      %p101 = scmp.eq.s32.totalorder %s20, 0
      %p102 = por %p100, %p101
      %p103 = scmp.ne.s32.totalorder %s89, %s90
      %p104 = scmp.eq.s32.totalorder %s21, 1
      %p105 = por %p103, %p104
      %p107 = scmp.ne.s32.totalorder %s90, %s106
      %p108 = scmp.eq.s32.totalorder %s21, 0
      %p109 = por %p107, %p108
      %p110 = scmp.le.s32.totalorder 1, %s15
      %p111 = scmp.lt.s32.totalorder %s15, 3
      %p112 = pnand %p110, %p111
      %p113 = pneg %p112
      // Predicated region
      $region9: #{tpu_custom_call.1} parent=5 // pred_check
        _
      $region10: #{tpu_custom_call.1} parent=5 // pred_check_branch
        %115 = sbr.rel (%p112) target = $region12
      $region11: #{tpu_custom_call.1} parent=5 // pred_region
        %s116 = ssub.s32 %s15, 1
        // Predicated region
        $region13: #{tpu_custom_call.1} parent=11 // pred_check
          %p117 = pneg %p76
        $region14: #{tpu_custom_call.1} parent=11 // pred_check_branch
          %119 = sbr.rel (%p117) target = $region16
        $region15: #{tpu_custom_call.1} parent=11 // pred_region
          %s121 = ssub.s32 7168, 7168
          %122 = vsyncadd [#allocation8], %s121
          %s123 = sshll.u32 [#allocation7], 4
          %s124 = int_to_ptr.vmem [resolvable:$true] %s123
          %129 = dma.hbm_to_vmem [thread:$0]  %s1, 7168, %s124, [#allocation8], 64, 64, 4
        $region16: #{tpu_custom_call.1} parent=11 // pred_fallthru
          _
      $region12: #{tpu_custom_call.1} parent=5 // pred_fallthru
        _
      %p130 = scmp.lt.s32.totalorder %s15, 2
      // Predicated region
      $region17: #{tpu_custom_call.1} parent=5 // pred_check
        %p131 = pneg %p130
      $region18: #{tpu_custom_call.1} parent=5 // pred_check_branch
        %133 = sbr.rel (%p131) target = $region20
      $region19: #{tpu_custom_call.1} parent=5 // pred_region
        // Predicated region
        $region21: #{tpu_custom_call.1} parent=19 // pred_check
          %p134 = pneg %p49
        $region22: #{tpu_custom_call.1} parent=19 // pred_check_branch
          %136 = sbr.rel (%p134) target = $region24
        $region23: #{tpu_custom_call.1} parent=19 // pred_region
          %s137 = sand.u32 %s39, 1
          %s138 = scalar_lea.sflag [#allocation5], %s137
          %s139 = sand.u32 %s39, 1
          %s140 = smul.addr %s139, 8
          %s141 = scalar_lea.vmem [#allocation4], %s140
          %s143 = ssub.s32 128, 128
          %144 = vsyncadd %s138, %s143
          %s145 = smul.addr %s23, 2
          %s146 = smul.addr %s22, 2
          %s147 = sadd.s32 %s145, %s146
          %s148 = smul.addr %s147, 64
          %s149 = scalar_lea.hbm %s0, %s148
          %s151 = sshll.u32 %s141, 4
          %s152 = int_to_ptr.vmem [resolvable:$true] %s151
          %154 = dma.hbm_to_vmem [thread:$0]  %s149, 128, %s152, %s138
        $region24: #{tpu_custom_call.1} parent=19 // pred_fallthru
          _
      $region20: #{tpu_custom_call.1} parent=5 // pred_fallthru
        _
      %p155 = scmp.le.s32.totalorder 1, %s15
      %p156 = scmp.lt.s32.totalorder %s15, 3
      %p157 = pnand %p155, %p156
      %p158 = pneg %p157
      // Predicated region
      $region25: #{tpu_custom_call.1} parent=5 // pred_check
        _
      $region26: #{tpu_custom_call.1} parent=5 // pred_check_branch
        %160 = sbr.rel (%p157) target = $region28
      $region27: #{tpu_custom_call.1} parent=5 // pred_region
        %s161 = ssub.s32 %s15, 1
        %s162 = sand.u32 %s42, 1
        %s163 = scalar_lea.sflag [#allocation5], %s162
        %s164 = sand.u32 %s42, 1
        %s165 = smul.addr %s164, 8
        %s166 = scalar_lea.vmem [#allocation4], %s165
        // Predicated region
        $region29: #{tpu_custom_call.1} parent=27 // pred_check
          %p167 = pneg %p55
        $region30: #{tpu_custom_call.1} parent=27 // pred_check_branch
          %169 = sbr.rel (%p167) target = $region32
        $region31: #{tpu_custom_call.1} parent=27 // pred_region
          %170 = dma.done %s163, 128
        $region32: #{tpu_custom_call.1} parent=27 // pred_fallthru
          _
        // Predicated region
        $region33: #{tpu_custom_call.1} parent=27 // pred_check
          %p171 = pneg %p76
        $region34: #{tpu_custom_call.1} parent=27 // pred_check_branch
          %173 = sbr.rel (%p171) target = $region36
        $region35: #{tpu_custom_call.1} parent=27 // pred_region
          %174 = dma.done [#allocation8], 7168
        $region36: #{tpu_custom_call.1} parent=27 // pred_fallthru
          _
        %s175 = sand.u32 %s42, 1
        %s176 = scalar_lea.sflag [#allocation5], %s175
        %s177 = sand.u32 %s42, 1
        %s178 = smul.addr %s177, 8
        %s179 = scalar_lea.vmem [#allocation4], %s178
        %p180 = pneg %p55
        %p181 = pneg %p52
        %p182 = pneg %p76
        %p183 = pneg %p73
        %p184 = pneg %p102
        %p185 = pneg %p99
        %s186 = sand.u32 %s89, 1
        %s187 = scalar_lea.sflag [#allocation6], %s186
        %s188 = sand.u32 %s89, 1
        %s189 = smul.addr %s188, 16
        %s190 = scalar_lea.vmem [#allocation9], %s189
        %v192 = vld [vmem:[%s166] sm:$0xff]
        %v194 = vcombine.high %v192, %v192
        %vm196 = vcmask 1043456
        %v197 = vsel %vm196, %v192, -inf
        %v198 = vrot.slane %v197, 4
        %v199 = vmax.f32 %v197, %v198
        %v200 = vrot.slane %v199, 2
        %v201 = vmax.f32 %v199, %v200
        %v202 = vrot.slane %v201, 1
        %v203 = vmax.f32 %v201, %v202
        %v204 = vsel %vm196, %v194, -inf
        %v205 = vrot.slane %v204, 4
        %v206 = vmax.f32 %v204, %v205
        %v207 = vrot.slane %v206, 2
        %v208 = vmax.f32 %v206, %v207
        %v209 = vrot.slane %v208, 1
        %v210 = vmax.f32 %v208, %v209
        %p211 = scmp.eq.s32.totalorder %s25, 0
        // Predicated region
        $region37: #{tpu_custom_call.1} parent=27 // pred_check
          %p212 = pneg %p211
        $region38: #{tpu_custom_call.1} parent=27 // pred_check_branch
          %214 = sbr.rel (%p212) target = $region40
        $region39: #{tpu_custom_call.1} parent=27 // pred_region
          %v217 = vcombine.low %v203, %v210
          %v219 = vunpack.c.l.s4 1966171168
          %v220 = vunpack.c.0.s8 %v219
          %v221 = vlaneseq
          %v222 = vshrl.u32 %v221, 7
          %v223 = vsub.s32 %v220, %v222
          %v224 = vrot.slane %v217, %v223
          %v226 = vunpack.c.l.s4 1966171168
          %v227 = vunpack.c.0.s8 %v226
          %v228 = vlaneseq
          %v229 = vshrl.u32 %v228, 7
          %v230 = vsub.s32 %v227, %v229
          %v231 = vrot.slane %v224, %v230
          %v233 = vlaneseq
          %vm234 = vcmp.ge.s32.totalorder %v233, 0
          %vm235 = vcmp.lt.s32.totalorder %v233, 256
          %vm236 = vmand %vm234, %vm235
          %237 = vst.msk [vmem:[#allocation2] sm:$0x3] %vm236, %v231
        $region40: #{tpu_custom_call.1} parent=27 // pred_fallthru
          _
        %p238 = scmp.gt.s32.totalorder %s25, 0
        // Predicated region
        $region41: #{tpu_custom_call.1} parent=27 // pred_check
          %p239 = pneg %p238
        $region42: #{tpu_custom_call.1} parent=27 // pred_check_branch
          %241 = sbr.rel (%p239) target = $region44
        $region43: #{tpu_custom_call.1} parent=27 // pred_region
          %v242 = vld [vmem:[#allocation2] sm:$0x3]
          %v245 = vcombine.low %v203, %v210
          %v247 = vunpack.c.l.s4 1966171168
          %v248 = vunpack.c.0.s8 %v247
          %v249 = vlaneseq
          %v250 = vshrl.u32 %v249, 7
          %v251 = vsub.s32 %v248, %v250
          %v252 = vrot.slane %v245, %v251
          %v254 = vunpack.c.l.s4 1966171168
          %v255 = vunpack.c.0.s8 %v254
          %v256 = vlaneseq
          %v257 = vshrl.u32 %v256, 7
          %v258 = vsub.s32 %v255, %v257
          %v259 = vrot.slane %v252, %v258
          %v261 = vmax.f32 %v242, %v259
          %v262 = vlaneseq
          %vm263 = vcmp.ge.s32.totalorder %v262, 0
          %vm264 = vcmp.lt.s32.totalorder %v262, 256
          %vm265 = vmand %vm263, %vm264
          %266 = vst.msk [vmem:[#allocation2] sm:$0x3] %vm265, %v261
        $region44: #{tpu_custom_call.1} parent=27 // pred_fallthru
          _
        // Predicated region
        $region45: #{tpu_custom_call.1} parent=27 // pred_check
          %p267 = pneg %p211
        $region46: #{tpu_custom_call.1} parent=27 // pred_check_branch
          %269 = sbr.rel (%p267) target = $region48
        $region47: #{tpu_custom_call.1} parent=27 // pred_region
          %270 = vst [vmem:[#allocation3] sm:$0xff] 0.0
          %271 = vst [vmem:[#allocation3 + $0x8] sm:$0xff] 0.0
          %272 = vst [vmem:[#allocation3 + $0x10] sm:$0x3f] 0.0
          %v273 = vld [vmem:[#allocation2] sm:$0x1]
          %vm274 = vcmask 122880
          %275 = vst.msk [vmem:[#allocation3 + $0x3] sm:$0x1] %vm274, %v273
          %v276 = vld [vmem:[#allocation2] sm:$0x1]
          %v278 = vlaneseq
          %v279 = vshrl.u32 %v278, 7
          %v280 = vsub.s32 0, %v279
          %v281 = vrot.slane %v276, %v280
          %282 = vrot.lane.b32.xlu0 %v281, 112
          %v283 = vpop.permute.xlu0 %282
          %285 = vst.msk [vmem:[#allocation3 + $0x4] sm:$0x1] %vm274, %v283
          %v286 = vld [vmem:[#allocation2] sm:$0x1]
          %v288 = vlaneseq
          %v289 = vshrl.u32 %v288, 7
          %v290 = vsub.s32 0, %v289
          %v291 = vrot.slane %v286, %v290
          %292 = vrot.lane.b32.xlu0 %v291, 96
          %v293 = vpop.permute.xlu0 %292
          %295 = vst.msk [vmem:[#allocation3 + $0x5] sm:$0x1] %vm274, %v293
          %v296 = vld [vmem:[#allocation2] sm:$0x1]
          %v298 = vlaneseq
          %v299 = vshrl.u32 %v298, 7
          %v300 = vsub.s32 0, %v299
          %v301 = vrot.slane %v296, %v300
          %302 = vrot.lane.b32.xlu0 %v301, 80
          %v303 = vpop.permute.xlu0 %302
          %305 = vst.msk [vmem:[#allocation3 + $0x6] sm:$0x1] %vm274, %v303
          %v306 = vld [vmem:[#allocation2] sm:$0x1]
          %v308 = vlaneseq
          %v309 = vshrl.u32 %v308, 7
          %v310 = vsub.s32 0, %v309
          %v311 = vrot.slane %v306, %v310
          %312 = vrot.lane.b32.xlu0 %v311, 64
          %v313 = vpop.permute.xlu0 %312
          %315 = vst.msk [vmem:[#allocation3 + $0x7] sm:$0x1] %vm274, %v313
          %v316 = vld [vmem:[#allocation2] sm:$0x1]
          %v318 = vlaneseq
          %v319 = vshrl.u32 %v318, 7
          %v320 = vsub.s32 0, %v319
          %v321 = vrot.slane %v316, %v320
          %322 = vrot.lane.b32.xlu0 %v321, 48
          %v323 = vpop.permute.xlu0 %322
          %325 = vst.msk [vmem:[#allocation3 + $0x8] sm:$0x1] %vm274, %v323
          %v326 = vld [vmem:[#allocation2] sm:$0x1]
          %v328 = vlaneseq
          %v329 = vshrl.u32 %v328, 7
          %v330 = vsub.s32 0, %v329
          %v331 = vrot.slane %v326, %v330
          %332 = vrot.lane.b32.xlu0 %v331, 32
          %v333 = vpop.permute.xlu0 %332
          %335 = vst.msk [vmem:[#allocation3 + $0x9] sm:$0x1] %vm274, %v333
          %v336 = vld [vmem:[#allocation2] sm:$0x1]
          %v338 = vlaneseq
          %v339 = vshrl.u32 %v338, 7
          %v340 = vsub.s32 0, %v339
          %v341 = vrot.slane %v336, %v340
          %342 = vrot.lane.b32.xlu0 %v341, 16
          %v343 = vpop.permute.xlu0 %342
          %345 = vst.msk [vmem:[#allocation3 + $0xa] sm:$0x1] %vm274, %v343
          %v346 = vld [vmem:[#allocation2 + $0x1] sm:$0x1]
          %347 = vst.msk [vmem:[#allocation3 + $0xb] sm:$0x1] %vm274, %v346
          %v348 = vld [vmem:[#allocation2 + $0x1] sm:$0x1]
          %v350 = vlaneseq
          %v351 = vshrl.u32 %v350, 7
          %v352 = vsub.s32 0, %v351
          %v353 = vrot.slane %v348, %v352
          %354 = vrot.lane.b32.xlu0 %v353, 112
          %v355 = vpop.permute.xlu0 %354
          %357 = vst.msk [vmem:[#allocation3 + $0xc] sm:$0x1] %vm274, %v355
          %v358 = vld [vmem:[#allocation2 + $0x1] sm:$0x1]
          %v360 = vlaneseq
          %v361 = vshrl.u32 %v360, 7
          %v362 = vsub.s32 0, %v361
          %v363 = vrot.slane %v358, %v362
          %364 = vrot.lane.b32.xlu0 %v363, 96
          %v365 = vpop.permute.xlu0 %364
          %367 = vst.msk [vmem:[#allocation3 + $0xd] sm:$0x1] %vm274, %v365
          %v368 = vld [vmem:[#allocation2 + $0x1] sm:$0x1]
          %v370 = vlaneseq
          %v371 = vshrl.u32 %v370, 7
          %v372 = vsub.s32 0, %v371
          %v373 = vrot.slane %v368, %v372
          %374 = vrot.lane.b32.xlu0 %v373, 80
          %v375 = vpop.permute.xlu0 %374
          %377 = vst.msk [vmem:[#allocation3 + $0xe] sm:$0x1] %vm274, %v375
          %v378 = vld [vmem:[#allocation2 + $0x1] sm:$0x1]
          %v380 = vlaneseq
          %v381 = vshrl.u32 %v380, 7
          %v382 = vsub.s32 0, %v381
          %v383 = vrot.slane %v378, %v382
          %384 = vrot.lane.b32.xlu0 %v383, 64
          %v385 = vpop.permute.xlu0 %384
          %387 = vst.msk [vmem:[#allocation3 + $0xf] sm:$0x1] %vm274, %v385
          %v388 = vld [vmem:[#allocation2 + $0x1] sm:$0x1]
          %v390 = vlaneseq
          %v391 = vshrl.u32 %v390, 7
          %v392 = vsub.s32 0, %v391
          %v393 = vrot.slane %v388, %v392
          %394 = vrot.lane.b32.xlu0 %v393, 48
          %v395 = vpop.permute.xlu0 %394
          %397 = vst.msk [vmem:[#allocation3 + $0x10] sm:$0x1] %vm274, %v395
          %v398 = vld [vmem:[#allocation2 + $0x1] sm:$0x1]
          %v400 = vlaneseq
          %v401 = vshrl.u32 %v400, 7
          %v402 = vsub.s32 0, %v401
          %v403 = vrot.slane %v398, %v402
          %404 = vrot.lane.b32.xlu0 %v403, 32
          %v405 = vpop.permute.xlu0 %404
          %407 = vst.msk [vmem:[#allocation3 + $0x11] sm:$0x1] %vm274, %v405
          %v408 = vld [vmem:[#allocation2 + $0x1] sm:$0x1]
          %v410 = vlaneseq
          %v411 = vshrl.u32 %v410, 7
          %v412 = vsub.s32 0, %v411
          %v413 = vrot.slane %v408, %v412
          %414 = vrot.lane.b32.xlu0 %v413, 16
          %v415 = vpop.permute.xlu0 %414
          %417 = vst.msk [vmem:[#allocation3 + $0x12] sm:$0x1] %vm274, %v415
          %v418 = vld [vmem:[#allocation3] sm:$0xff]
          %v419 = vld [vmem:[#allocation3 + $0x8] sm:$0xff]
          %v420 = vpack.c.bf16 %v419, %v418
          %v421 = vld [vmem:[#allocation7] sm:$0xf]
          %v422 = vld [vmem:[#allocation7 + $0x4] sm:$0xf]
          %v423 = vld [vmem:[#allocation7 + $0x8] sm:$0xf]
          %v424 = vld [vmem:[#allocation7 + $0xc] sm:$0xf]
          %v425 = vld [vmem:[#allocation7 + $0x10] sm:$0xf]
          %v426 = vld [vmem:[#allocation7 + $0x14] sm:$0xf]
          %v427 = vld [vmem:[#allocation7 + $0x18] sm:$0xf]
          %v428 = vld [vmem:[#allocation7 + $0x1c] sm:$0xf]
          %v429 = vld [vmem:[#allocation7 + $0x20] sm:$0xf]
          %v430 = vld [vmem:[#allocation7 + $0x24] sm:$0xf]
          %v431 = vld [vmem:[#allocation7 + $0x28] sm:$0xf]
          %v432 = vld [vmem:[#allocation7 + $0x2c] sm:$0xf]
          %v433 = vld [vmem:[#allocation7 + $0x30] sm:$0xf]
          %v434 = vld [vmem:[#allocation7 + $0x34] sm:$0xf]
          %v435 = vld [vmem:[#allocation7 + $0x38] sm:$0xf]
          %v436 = vld [vmem:[#allocation7 + $0x3c] sm:$0xf]
          %v437 = vld [vmem:[#allocation3 + $0x1] sm:$0xff]
          %v438 = vld [vmem:[#allocation3 + $0x9] sm:$0xff]
          %v439 = vpack.c.bf16 %v438, %v437
          %s440 = scalar_lea.vmem [#allocation7], 64
          %v441 = vld [vmem:[%s440] sm:$0xf]
          %v442 = vld [vmem:[%s440 + $0x4] sm:$0xf]
          %v443 = vld [vmem:[%s440 + $0x8] sm:$0xf]
          %v444 = vld [vmem:[%s440 + $0xc] sm:$0xf]
          %v445 = vld [vmem:[%s440 + $0x10] sm:$0xf]
          %v446 = vld [vmem:[%s440 + $0x14] sm:$0xf]
          %v447 = vld [vmem:[%s440 + $0x18] sm:$0xf]
          %v448 = vld [vmem:[%s440 + $0x1c] sm:$0xf]
          %v449 = vld [vmem:[%s440 + $0x20] sm:$0xf]
          %v450 = vld [vmem:[%s440 + $0x24] sm:$0xf]
          %v451 = vld [vmem:[%s440 + $0x28] sm:$0xf]
          %v452 = vld [vmem:[%s440 + $0x2c] sm:$0xf]
          %v453 = vld [vmem:[%s440 + $0x30] sm:$0xf]
          %v454 = vld [vmem:[%s440 + $0x34] sm:$0xf]
          %v455 = vld [vmem:[%s440 + $0x38] sm:$0xf]
          %v456 = vld [vmem:[%s440 + $0x3c] sm:$0xf]
          %v473 = vunpack.c.l.b16 %v441
          %v474 = vunpack.c.l.b16 %v442
          %v475 = vunpack.c.l.b16 %v443
          %v476 = vunpack.c.l.b16 %v444
          %v477 = vunpack.c.l.b16 %v445
          %v478 = vunpack.c.l.b16 %v446
          %v479 = vunpack.c.l.b16 %v447
          %v480 = vunpack.c.l.b16 %v448
          %v481 = vunpack.c.l.b16 %v449
          %v482 = vunpack.c.l.b16 %v450
          %v483 = vunpack.c.l.b16 %v451
          %v484 = vunpack.c.l.b16 %v452
          %v485 = vunpack.c.l.b16 %v453
          %v486 = vunpack.c.l.b16 %v454
          %v487 = vunpack.c.l.b16 %v455
          %v488 = vunpack.c.l.b16 %v456
          %v489 = vpack.c.b16 %v474, %v473
          %v490 = vpack.c.b16 %v476, %v475
          %v491 = vpack.c.b16 %v478, %v477
          %v492 = vpack.c.b16 %v480, %v479
          %v493 = vpack.c.b16 %v482, %v481
          %v494 = vpack.c.b16 %v484, %v483
          %v495 = vpack.c.b16 %v486, %v485
          %v496 = vpack.c.b16 %v488, %v487
          %505 = vmatprep.subr.bf16.mxu0 0
          %506 = vmatpush1.bf16.msra.mxu0 %v489
          %507 = vmatprep.subr.bf16.mxu0 0
          %508 = vmatpush1.bf16.msra.mxu0 %v490
          %509 = vmatprep.subr.bf16.mxu0 0
          %510 = vmatpush1.bf16.msra.mxu0 %v491
          %511 = vmatprep.subr.bf16.mxu0 0
          %512 = vmatpush1.bf16.msra.mxu0 %v492
          %513 = vmatprep.subr.bf16.mxu0 0
          %514 = vmatpush1.bf16.msra.mxu0 %v493
          %515 = vmatprep.subr.bf16.mxu0 0
          %516 = vmatpush1.bf16.msra.mxu0 %v494
          %517 = vmatprep.subr.bf16.mxu0 0
          %518 = vmatpush1.bf16.msra.mxu0 %v495
          %519 = vmatprep.subr.bf16.mxu0 0
          %520 = vmatpush1.bf16.msra.mxu0 %v496
          %521 = vmatprep.subr.bf16.mxu0 0
          %522 = vmatpush1.bf16.msra.mxu0 0
          %523 = vmatprep.subr.bf16.mxu0 0
          %524 = vmatpush1.bf16.msra.mxu0 0
          %525 = vmatprep.subr.bf16.mxu0 0
          %526 = vmatpush1.bf16.msra.mxu0 0
          %527 = vmatprep.subr.bf16.mxu0 0
          %528 = vmatpush1.bf16.msra.mxu0 0
          %529 = vmatprep.subr.bf16.mxu0 0
          %530 = vmatpush1.bf16.msra.mxu0 0
          %531 = vmatprep.subr.bf16.mxu0 0
          %532 = vmatpush1.bf16.msra.mxu0 0
          %533 = vmatprep.subr.bf16.mxu0 0
          %534 = vmatpush1.bf16.msra.mxu0 0
          %535 = vmatprep.subr.bf16.mxu0 0
          %536 = vmatpush1.bf16.msra.mxu0 0
          %537 = vmatprep.mubr.bf16.mxu0 0
          %538 = vmatmul.mubr.bf16.gmra.mrb[0].mxu0 %v439
          %v539 = vpop.f32.mrb[0].mxu0
          %v540 = vadd.f32 0.0, %v539
          %v541 = vpop.f32.mrb[0].mxu0
          %v542 = vpop.f32.mrb[0].mxu0
          %v543 = vadd.f32 0.0, %v542
          %v544 = vpop.f32.mrb[0].mxu0
          %545 = vdwg.mxu0
          %v562 = vunpack.c.l.b16 %v421
          %v563 = vunpack.c.l.b16 %v422
          %v564 = vunpack.c.l.b16 %v423
          %v565 = vunpack.c.l.b16 %v424
          %v566 = vunpack.c.l.b16 %v425
          %v567 = vunpack.c.l.b16 %v426
          %v568 = vunpack.c.l.b16 %v427
          %v569 = vunpack.c.l.b16 %v428
          %v570 = vunpack.c.l.b16 %v429
          %v571 = vunpack.c.l.b16 %v430
          %v572 = vunpack.c.l.b16 %v431
          %v573 = vunpack.c.l.b16 %v432
          %v574 = vunpack.c.l.b16 %v433
          %v575 = vunpack.c.l.b16 %v434
          %v576 = vunpack.c.l.b16 %v435
          %v577 = vunpack.c.l.b16 %v436
          %v578 = vpack.c.b16 %v563, %v562
          %v579 = vpack.c.b16 %v565, %v564
          %v580 = vpack.c.b16 %v567, %v566
          %v581 = vpack.c.b16 %v569, %v568
          %v582 = vpack.c.b16 %v571, %v570
          %v583 = vpack.c.b16 %v573, %v572
          %v584 = vpack.c.b16 %v575, %v574
          %v585 = vpack.c.b16 %v577, %v576
          %594 = vmatprep.subr.bf16.mxu0 0
          %595 = vmatpush1.bf16.msra.mxu0 %v578
          %596 = vmatprep.subr.bf16.mxu0 0
          %597 = vmatpush1.bf16.msra.mxu0 %v579
          %598 = vmatprep.subr.bf16.mxu0 0
          %599 = vmatpush1.bf16.msra.mxu0 %v580
          %600 = vmatprep.subr.bf16.mxu0 0
          %601 = vmatpush1.bf16.msra.mxu0 %v581
          %602 = vmatprep.subr.bf16.mxu0 0
          %603 = vmatpush1.bf16.msra.mxu0 %v582
          %604 = vmatprep.subr.bf16.mxu0 0
          %605 = vmatpush1.bf16.msra.mxu0 %v583
          %606 = vmatprep.subr.bf16.mxu0 0
          %607 = vmatpush1.bf16.msra.mxu0 %v584
          %608 = vmatprep.subr.bf16.mxu0 0
          %609 = vmatpush1.bf16.msra.mxu0 %v585
          %610 = vmatprep.subr.bf16.mxu0 0
          %611 = vmatpush1.bf16.msra.mxu0 0
          %612 = vmatprep.subr.bf16.mxu0 0
          %613 = vmatpush1.bf16.msra.mxu0 0
          %614 = vmatprep.subr.bf16.mxu0 0
          %615 = vmatpush1.bf16.msra.mxu0 0
          %616 = vmatprep.subr.bf16.mxu0 0
          %617 = vmatpush1.bf16.msra.mxu0 0
          %618 = vmatprep.subr.bf16.mxu0 0
          %619 = vmatpush1.bf16.msra.mxu0 0
          %620 = vmatprep.subr.bf16.mxu0 0
          %621 = vmatpush1.bf16.msra.mxu0 0
          %622 = vmatprep.subr.bf16.mxu0 0
          %623 = vmatpush1.bf16.msra.mxu0 0
          %624 = vmatprep.subr.bf16.mxu0 0
          %625 = vmatpush1.bf16.msra.mxu0 0
          %626 = vmatprep.mubr.bf16.mxu0 0
          %627 = vmatmul.mubr.bf16.gmra.mrb[0].mxu0 %v420
          %v628 = vpop.f32.mrb[0].mxu0
          %v629 = vadd.f32 %v540, %v628
          %v630 = vpop.f32.mrb[0].mxu0
          %v631 = vpop.f32.mrb[0].mxu0
          %v632 = vadd.f32 %v543, %v631
          %v633 = vpop.f32.mrb[0].mxu0
          %634 = vdwg.mxu0
          %v635 = vld [vmem:[#allocation3 + $0x2] sm:$0xff]
          %v636 = vld [vmem:[#allocation3 + $0xa] sm:$0xff]
          %v637 = vpack.c.bf16 %v636, %v635
          %s638 = scalar_lea.vmem [#allocation7], 128
          %v639 = vld [vmem:[%s638] sm:$0xf]
          %v640 = vld [vmem:[%s638 + $0x4] sm:$0xf]
          %v641 = vld [vmem:[%s638 + $0x8] sm:$0xf]
          %v642 = vld [vmem:[%s638 + $0xc] sm:$0xf]
          %v643 = vld [vmem:[%s638 + $0x10] sm:$0xf]
          %v644 = vld [vmem:[%s638 + $0x14] sm:$0xf]
          %v645 = vld [vmem:[%s638 + $0x18] sm:$0xf]
          %v646 = vld [vmem:[%s638 + $0x1c] sm:$0xf]
          %v647 = vld [vmem:[%s638 + $0x20] sm:$0xf]
          %v648 = vld [vmem:[%s638 + $0x24] sm:$0xf]
          %v649 = vld [vmem:[%s638 + $0x28] sm:$0xf]
          %v650 = vld [vmem:[%s638 + $0x2c] sm:$0xf]
          %v651 = vld [vmem:[%s638 + $0x30] sm:$0xf]
          %v652 = vld [vmem:[%s638 + $0x34] sm:$0xf]
          %v653 = vld [vmem:[%s638 + $0x38] sm:$0xf]
          %v654 = vld [vmem:[%s638 + $0x3c] sm:$0xf]
          %v671 = vunpack.c.l.b16 %v639
          %v672 = vunpack.c.l.b16 %v640
          %v673 = vunpack.c.l.b16 %v641
          %v674 = vunpack.c.l.b16 %v642
          %v675 = vunpack.c.l.b16 %v643
          %v676 = vunpack.c.l.b16 %v644
          %v677 = vunpack.c.l.b16 %v645
          %v678 = vunpack.c.l.b16 %v646
          %v679 = vunpack.c.l.b16 %v647
          %v680 = vunpack.c.l.b16 %v648
          %v681 = vunpack.c.l.b16 %v649
          %v682 = vunpack.c.l.b16 %v650
          %v683 = vunpack.c.l.b16 %v651
          %v684 = vunpack.c.l.b16 %v652
          %v685 = vunpack.c.l.b16 %v653
          %v686 = vunpack.c.l.b16 %v654
          %v687 = vpack.c.b16 %v672, %v671
          %v688 = vpack.c.b16 %v674, %v673
          %v689 = vpack.c.b16 %v676, %v675
          %v690 = vpack.c.b16 %v678, %v677
          %v691 = vpack.c.b16 %v680, %v679
          %v692 = vpack.c.b16 %v682, %v681
          %v693 = vpack.c.b16 %v684, %v683
          %v694 = vpack.c.b16 %v686, %v685
          %703 = vmatprep.subr.bf16.mxu0 0
          %704 = vmatpush1.bf16.msra.mxu0 %v687
          %705 = vmatprep.subr.bf16.mxu0 0
          %706 = vmatpush1.bf16.msra.mxu0 %v688
          %707 = vmatprep.subr.bf16.mxu0 0
          %708 = vmatpush1.bf16.msra.mxu0 %v689
          %709 = vmatprep.subr.bf16.mxu0 0
          %710 = vmatpush1.bf16.msra.mxu0 %v690
          %711 = vmatprep.subr.bf16.mxu0 0
          %712 = vmatpush1.bf16.msra.mxu0 %v691
          %713 = vmatprep.subr.bf16.mxu0 0
          %714 = vmatpush1.bf16.msra.mxu0 %v692
          %715 = vmatprep.subr.bf16.mxu0 0
          %716 = vmatpush1.bf16.msra.mxu0 %v693
          %717 = vmatprep.subr.bf16.mxu0 0
          %718 = vmatpush1.bf16.msra.mxu0 %v694
          %719 = vmatprep.subr.bf16.mxu0 0
          %720 = vmatpush1.bf16.msra.mxu0 0
          %721 = vmatprep.subr.bf16.mxu0 0
          %722 = vmatpush1.bf16.msra.mxu0 0
          %723 = vmatprep.subr.bf16.mxu0 0
          %724 = vmatpush1.bf16.msra.mxu0 0
          %725 = vmatprep.subr.bf16.mxu0 0
          %726 = vmatpush1.bf16.msra.mxu0 0
          %727 = vmatprep.subr.bf16.mxu0 0
          %728 = vmatpush1.bf16.msra.mxu0 0
          %729 = vmatprep.subr.bf16.mxu0 0
          %730 = vmatpush1.bf16.msra.mxu0 0
          %731 = vmatprep.subr.bf16.mxu0 0
          %732 = vmatpush1.bf16.msra.mxu0 0
          %733 = vmatprep.subr.bf16.mxu0 0
          %734 = vmatpush1.bf16.msra.mxu0 0
          %735 = vmatprep.mubr.bf16.mxu0 0
          %736 = vmatmul.mubr.bf16.gmra.mrb[0].mxu0 %v637
          %v737 = vpop.f32.mrb[0].mxu0
          %v738 = vadd.f32 0.0, %v737
          %v739 = vpop.f32.mrb[0].mxu0
          %v740 = vpop.f32.mrb[0].mxu0
          %v741 = vadd.f32 0.0, %v740
          %v742 = vpop.f32.mrb[0].mxu0
          %743 = vdwg.mxu0
          %v744 = vadd.f32 %v629, %v738
          %v745 = vadd.f32 %v632, %v741
          %v746 = vld [vmem:[#allocation3 + $0x3] sm:$0xff]
          %v747 = vld [vmem:[#allocation3 + $0xb] sm:$0xff]
          %v748 = vpack.c.bf16 %v747, %v746
          %s749 = scalar_lea.vmem [#allocation7], 192
          %v750 = vld [vmem:[%s749] sm:$0xf]
          %v751 = vld [vmem:[%s749 + $0x4] sm:$0xf]
          %v752 = vld [vmem:[%s749 + $0x8] sm:$0xf]
          %v753 = vld [vmem:[%s749 + $0xc] sm:$0xf]
          %v754 = vld [vmem:[%s749 + $0x10] sm:$0xf]
          %v755 = vld [vmem:[%s749 + $0x14] sm:$0xf]
          %v756 = vld [vmem:[%s749 + $0x18] sm:$0xf]
          %v757 = vld [vmem:[%s749 + $0x1c] sm:$0xf]
          %v758 = vld [vmem:[%s749 + $0x20] sm:$0xf]
          %v759 = vld [vmem:[%s749 + $0x24] sm:$0xf]
          %v760 = vld [vmem:[%s749 + $0x28] sm:$0xf]
          %v761 = vld [vmem:[%s749 + $0x2c] sm:$0xf]
          %v762 = vld [vmem:[%s749 + $0x30] sm:$0xf]
          %v763 = vld [vmem:[%s749 + $0x34] sm:$0xf]
          %v764 = vld [vmem:[%s749 + $0x38] sm:$0xf]
          %v765 = vld [vmem:[%s749 + $0x3c] sm:$0xf]
          %v782 = vunpack.c.l.b16 %v750
          %v783 = vunpack.c.l.b16 %v751
          %v784 = vunpack.c.l.b16 %v752
          %v785 = vunpack.c.l.b16 %v753
          %v786 = vunpack.c.l.b16 %v754
          %v787 = vunpack.c.l.b16 %v755
          %v788 = vunpack.c.l.b16 %v756
          %v789 = vunpack.c.l.b16 %v757
          %v790 = vunpack.c.l.b16 %v758
          %v791 = vunpack.c.l.b16 %v759
          %v792 = vunpack.c.l.b16 %v760
          %v793 = vunpack.c.l.b16 %v761
          %v794 = vunpack.c.l.b16 %v762
          %v795 = vunpack.c.l.b16 %v763
          %v796 = vunpack.c.l.b16 %v764
          %v797 = vunpack.c.l.b16 %v765
          %v798 = vpack.c.b16 %v783, %v782
          %v799 = vpack.c.b16 %v785, %v784
          %v800 = vpack.c.b16 %v787, %v786
          %v801 = vpack.c.b16 %v789, %v788
          %v802 = vpack.c.b16 %v791, %v790
          %v803 = vpack.c.b16 %v793, %v792
          %v804 = vpack.c.b16 %v795, %v794
          %v805 = vpack.c.b16 %v797, %v796
          %814 = vmatprep.subr.bf16.mxu0 0
          %815 = vmatpush1.bf16.msra.mxu0 %v798
          %816 = vmatprep.subr.bf16.mxu0 0
          %817 = vmatpush1.bf16.msra.mxu0 %v799
          %818 = vmatprep.subr.bf16.mxu0 0
          %819 = vmatpush1.bf16.msra.mxu0 %v800
          %820 = vmatprep.subr.bf16.mxu0 0
          %821 = vmatpush1.bf16.msra.mxu0 %v801
          %822 = vmatprep.subr.bf16.mxu0 0
          %823 = vmatpush1.bf16.msra.mxu0 %v802
          %824 = vmatprep.subr.bf16.mxu0 0
          %825 = vmatpush1.bf16.msra.mxu0 %v803
          %826 = vmatprep.subr.bf16.mxu0 0
          %827 = vmatpush1.bf16.msra.mxu0 %v804
          %828 = vmatprep.subr.bf16.mxu0 0
          %829 = vmatpush1.bf16.msra.mxu0 %v805
          %830 = vmatprep.subr.bf16.mxu0 0
          %831 = vmatpush1.bf16.msra.mxu0 0
          %832 = vmatprep.subr.bf16.mxu0 0
          %833 = vmatpush1.bf16.msra.mxu0 0
          %834 = vmatprep.subr.bf16.mxu0 0
          %835 = vmatpush1.bf16.msra.mxu0 0
          %836 = vmatprep.subr.bf16.mxu0 0
          %837 = vmatpush1.bf16.msra.mxu0 0
          %838 = vmatprep.subr.bf16.mxu0 0
          %839 = vmatpush1.bf16.msra.mxu0 0
          %840 = vmatprep.subr.bf16.mxu0 0
          %841 = vmatpush1.bf16.msra.mxu0 0
          %842 = vmatprep.subr.bf16.mxu0 0
          %843 = vmatpush1.bf16.msra.mxu0 0
          %844 = vmatprep.subr.bf16.mxu0 0
          %845 = vmatpush1.bf16.msra.mxu0 0
          %846 = vmatprep.mubr.bf16.mxu0 0
          %847 = vmatmul.mubr.bf16.gmra.mrb[0].mxu0 %v748
          %v848 = vpop.f32.mrb[0].mxu0
          %v849 = vadd.f32 0.0, %v848
          %v850 = vpop.f32.mrb[0].mxu0
          %v851 = vpop.f32.mrb[0].mxu0
          %v852 = vadd.f32 0.0, %v851
          %v853 = vpop.f32.mrb[0].mxu0
          %854 = vdwg.mxu0
          %v855 = vadd.f32 %v744, %v849
          %v856 = vadd.f32 %v745, %v852
          %v857 = vld [vmem:[#allocation3 + $0x4] sm:$0xff]
          %v858 = vld [vmem:[#allocation3 + $0xc] sm:$0xff]
          %v859 = vpack.c.bf16 %v858, %v857
          %s860 = scalar_lea.vmem [#allocation7], 256
          %v861 = vld [vmem:[%s860] sm:$0xf]
          %v862 = vld [vmem:[%s860 + $0x4] sm:$0xf]
          %v863 = vld [vmem:[%s860 + $0x8] sm:$0xf]
          %v864 = vld [vmem:[%s860 + $0xc] sm:$0xf]
          %v865 = vld [vmem:[%s860 + $0x10] sm:$0xf]
          %v866 = vld [vmem:[%s860 + $0x14] sm:$0xf]
          %v867 = vld [vmem:[%s860 + $0x18] sm:$0xf]
          %v868 = vld [vmem:[%s860 + $0x1c] sm:$0xf]
          %v869 = vld [vmem:[%s860 + $0x20] sm:$0xf]
          %v870 = vld [vmem:[%s860 + $0x24] sm:$0xf]
          %v871 = vld [vmem:[%s860 + $0x28] sm:$0xf]
          %v872 = vld [vmem:[%s860 + $0x2c] sm:$0xf]
          %v873 = vld [vmem:[%s860 + $0x30] sm:$0xf]
          %v874 = vld [vmem:[%s860 + $0x34] sm:$0xf]
          %v875 = vld [vmem:[%s860 + $0x38] sm:$0xf]
          %v876 = vld [vmem:[%s860 + $0x3c] sm:$0xf]
          %v893 = vunpack.c.l.b16 %v861
          %v894 = vunpack.c.l.b16 %v862
          %v895 = vunpack.c.l.b16 %v863
          %v896 = vunpack.c.l.b16 %v864
          %v897 = vunpack.c.l.b16 %v865
          %v898 = vunpack.c.l.b16 %v866
          %v899 = vunpack.c.l.b16 %v867
          %v900 = vunpack.c.l.b16 %v868
          %v901 = vunpack.c.l.b16 %v869
          %v902 = vunpack.c.l.b16 %v870
          %v903 = vunpack.c.l.b16 %v871
          %v904 = vunpack.c.l.b16 %v872
          %v905 = vunpack.c.l.b16 %v873
          %v906 = vunpack.c.l.b16 %v874
          %v907 = vunpack.c.l.b16 %v875
          %v908 = vunpack.c.l.b16 %v876
          %v909 = vpack.c.b16 %v894, %v893
          %v910 = vpack.c.b16 %v896, %v895
          %v911 = vpack.c.b16 %v898, %v897
          %v912 = vpack.c.b16 %v900, %v899
          %v913 = vpack.c.b16 %v902, %v901
          %v914 = vpack.c.b16 %v904, %v903
          %v915 = vpack.c.b16 %v906, %v905
          %v916 = vpack.c.b16 %v908, %v907
          %925 = vmatprep.subr.bf16.mxu0 0
          %926 = vmatpush1.bf16.msra.mxu0 %v909
          %927 = vmatprep.subr.bf16.mxu0 0
          %928 = vmatpush1.bf16.msra.mxu0 %v910
          %929 = vmatprep.subr.bf16.mxu0 0
          %930 = vmatpush1.bf16.msra.mxu0 %v911
          %931 = vmatprep.subr.bf16.mxu0 0
          %932 = vmatpush1.bf16.msra.mxu0 %v912
          %933 = vmatprep.subr.bf16.mxu0 0
          %934 = vmatpush1.bf16.msra.mxu0 %v913
          %935 = vmatprep.subr.bf16.mxu0 0
          %936 = vmatpush1.bf16.msra.mxu0 %v914
          %937 = vmatprep.subr.bf16.mxu0 0
          %938 = vmatpush1.bf16.msra.mxu0 %v915
          %939 = vmatprep.subr.bf16.mxu0 0
          %940 = vmatpush1.bf16.msra.mxu0 %v916
          %941 = vmatprep.subr.bf16.mxu0 0
          %942 = vmatpush1.bf16.msra.mxu0 0
          %943 = vmatprep.subr.bf16.mxu0 0
          %944 = vmatpush1.bf16.msra.mxu0 0
          %945 = vmatprep.subr.bf16.mxu0 0
          %946 = vmatpush1.bf16.msra.mxu0 0
          %947 = vmatprep.subr.bf16.mxu0 0
          %948 = vmatpush1.bf16.msra.mxu0 0
          %949 = vmatprep.subr.bf16.mxu0 0
          %950 = vmatpush1.bf16.msra.mxu0 0
          %951 = vmatprep.subr.bf16.mxu0 0
          %952 = vmatpush1.bf16.msra.mxu0 0
          %953 = vmatprep.subr.bf16.mxu0 0
          %954 = vmatpush1.bf16.msra.mxu0 0
          %955 = vmatprep.subr.bf16.mxu0 0
          %956 = vmatpush1.bf16.msra.mxu0 0
          %957 = vmatprep.mubr.bf16.mxu0 0
          %958 = vmatmul.mubr.bf16.gmra.mrb[0].mxu0 %v859
          %v959 = vpop.f32.mrb[0].mxu0
          %v960 = vadd.f32 0.0, %v959
          %v961 = vpop.f32.mrb[0].mxu0
          %v962 = vpop.f32.mrb[0].mxu0
          %v963 = vadd.f32 0.0, %v962
          %v964 = vpop.f32.mrb[0].mxu0
          %965 = vdwg.mxu0
          %v966 = vadd.f32 %v855, %v960
          %v967 = vadd.f32 %v856, %v963
          %v968 = vld [vmem:[#allocation3 + $0x5] sm:$0xff]
          %v969 = vld [vmem:[#allocation3 + $0xd] sm:$0xff]
          %v970 = vpack.c.bf16 %v969, %v968
          %s971 = scalar_lea.vmem [#allocation7], 320
          %v972 = vld [vmem:[%s971] sm:$0xf]
          %v973 = vld [vmem:[%s971 + $0x4] sm:$0xf]
          %v974 = vld [vmem:[%s971 + $0x8] sm:$0xf]
          %v975 = vld [vmem:[%s971 + $0xc] sm:$0xf]
          %v976 = vld [vmem:[%s971 + $0x10] sm:$0xf]
          %v977 = vld [vmem:[%s971 + $0x14] sm:$0xf]
          %v978 = vld [vmem:[%s971 + $0x18] sm:$0xf]
          %v979 = vld [vmem:[%s971 + $0x1c] sm:$0xf]
          %v980 = vld [vmem:[%s971 + $0x20] sm:$0xf]
          %v981 = vld [vmem:[%s971 + $0x24] sm:$0xf]
          %v982 = vld [vmem:[%s971 + $0x28] sm:$0xf]
          %v983 = vld [vmem:[%s971 + $0x2c] sm:$0xf]
          %v984 = vld [vmem:[%s971 + $0x30] sm:$0xf]
          %v985 = vld [vmem:[%s971 + $0x34] sm:$0xf]
          %v986 = vld [vmem:[%s971 + $0x38] sm:$0xf]
          %v987 = vld [vmem:[%s971 + $0x3c] sm:$0xf]
          %v1004 = vunpack.c.l.b16 %v972
          %v1005 = vunpack.c.l.b16 %v973
          %v1006 = vunpack.c.l.b16 %v974
          %v1007 = vunpack.c.l.b16 %v975
          %v1008 = vunpack.c.l.b16 %v976
          %v1009 = vunpack.c.l.b16 %v977
          %v1010 = vunpack.c.l.b16 %v978
          %v1011 = vunpack.c.l.b16 %v979
          %v1012 = vunpack.c.l.b16 %v980
          %v1013 = vunpack.c.l.b16 %v981
          %v1014 = vunpack.c.l.b16 %v982
          %v1015 = vunpack.c.l.b16 %v983
          %v1016 = vunpack.c.l.b16 %v984
          %v1017 = vunpack.c.l.b16 %v985
          %v1018 = vunpack.c.l.b16 %v986
          %v1019 = vunpack.c.l.b16 %v987
          %v1020 = vpack.c.b16 %v1005, %v1004
          %v1021 = vpack.c.b16 %v1007, %v1006
          %v1022 = vpack.c.b16 %v1009, %v1008
          %v1023 = vpack.c.b16 %v1011, %v1010
          %v1024 = vpack.c.b16 %v1013, %v1012
          %v1025 = vpack.c.b16 %v1015, %v1014
          %v1026 = vpack.c.b16 %v1017, %v1016
          %v1027 = vpack.c.b16 %v1019, %v1018
          %1036 = vmatprep.subr.bf16.mxu0 0
          %1037 = vmatpush1.bf16.msra.mxu0 %v1020
          %1038 = vmatprep.subr.bf16.mxu0 0
          %1039 = vmatpush1.bf16.msra.mxu0 %v1021
          %1040 = vmatprep.subr.bf16.mxu0 0
          %1041 = vmatpush1.bf16.msra.mxu0 %v1022
          %1042 = vmatprep.subr.bf16.mxu0 0
          %1043 = vmatpush1.bf16.msra.mxu0 %v1023
          %1044 = vmatprep.subr.bf16.mxu0 0
          %1045 = vmatpush1.bf16.msra.mxu0 %v1024
          %1046 = vmatprep.subr.bf16.mxu0 0
          %1047 = vmatpush1.bf16.msra.mxu0 %v1025
          %1048 = vmatprep.subr.bf16.mxu0 0
          %1049 = vmatpush1.bf16.msra.mxu0 %v1026
          %1050 = vmatprep.subr.bf16.mxu0 0
          %1051 = vmatpush1.bf16.msra.mxu0 %v1027
          %1052 = vmatprep.subr.bf16.mxu0 0
          %1053 = vmatpush1.bf16.msra.mxu0 0
          %1054 = vmatprep.subr.bf16.mxu0 0
          %1055 = vmatpush1.bf16.msra.mxu0 0
          %1056 = vmatprep.subr.bf16.mxu0 0
          %1057 = vmatpush1.bf16.msra.mxu0 0
          %1058 = vmatprep.subr.bf16.mxu0 0
          %1059 = vmatpush1.bf16.msra.mxu0 0
          %1060 = vmatprep.subr.bf16.mxu0 0
          %1061 = vmatpush1.bf16.msra.mxu0 0
          %1062 = vmatprep.subr.bf16.mxu0 0
          %1063 = vmatpush1.bf16.msra.mxu0 0
          %1064 = vmatprep.subr.bf16.mxu0 0
          %1065 = vmatpush1.bf16.msra.mxu0 0
          %1066 = vmatprep.subr.bf16.mxu0 0
          %1067 = vmatpush1.bf16.msra.mxu0 0
          %1068 = vmatprep.mubr.bf16.mxu0 0
          %1069 = vmatmul.mubr.bf16.gmra.mrb[0].mxu0 %v970
          %v1070 = vpop.f32.mrb[0].mxu0
          %v1071 = vadd.f32 0.0, %v1070
          %v1072 = vpop.f32.mrb[0].mxu0
          %v1073 = vpop.f32.mrb[0].mxu0
          %v1074 = vadd.f32 0.0, %v1073
          %v1075 = vpop.f32.mrb[0].mxu0
          %1076 = vdwg.mxu0
          %v1077 = vadd.f32 %v966, %v1071
          %v1078 = vadd.f32 %v967, %v1074
          %v1079 = vld [vmem:[#allocation3 + $0x6] sm:$0xff]
          %v1080 = vld [vmem:[#allocation3 + $0xe] sm:$0xff]
          %v1081 = vpack.c.bf16 %v1080, %v1079
          %s1082 = scalar_lea.vmem [#allocation7], 384
          %v1083 = vld [vmem:[%s1082] sm:$0xf]
          %v1084 = vld [vmem:[%s1082 + $0x4] sm:$0xf]
          %v1085 = vld [vmem:[%s1082 + $0x8] sm:$0xf]
          %v1086 = vld [vmem:[%s1082 + $0xc] sm:$0xf]
          %v1087 = vld [vmem:[%s1082 + $0x10] sm:$0xf]
          %v1088 = vld [vmem:[%s1082 + $0x14] sm:$0xf]
          %v1089 = vld [vmem:[%s1082 + $0x18] sm:$0xf]
          %v1090 = vld [vmem:[%s1082 + $0x1c] sm:$0xf]
          %v1091 = vld [vmem:[%s1082 + $0x20] sm:$0xf]
          %v1092 = vld [vmem:[%s1082 + $0x24] sm:$0xf]
          %v1093 = vld [vmem:[%s1082 + $0x28] sm:$0xf]
          %v1094 = vld [vmem:[%s1082 + $0x2c] sm:$0xf]
          %v1095 = vld [vmem:[%s1082 + $0x30] sm:$0xf]
          %v1096 = vld [vmem:[%s1082 + $0x34] sm:$0xf]
          %v1097 = vld [vmem:[%s1082 + $0x38] sm:$0xf]
          %v1098 = vld [vmem:[%s1082 + $0x3c] sm:$0xf]
          %v1115 = vunpack.c.l.b16 %v1083
          %v1116 = vunpack.c.l.b16 %v1084
          %v1117 = vunpack.c.l.b16 %v1085
          %v1118 = vunpack.c.l.b16 %v1086
          %v1119 = vunpack.c.l.b16 %v1087
          %v1120 = vunpack.c.l.b16 %v1088
          %v1121 = vunpack.c.l.b16 %v1089
          %v1122 = vunpack.c.l.b16 %v1090
          %v1123 = vunpack.c.l.b16 %v1091
          %v1124 = vunpack.c.l.b16 %v1092
          %v1125 = vunpack.c.l.b16 %v1093
          %v1126 = vunpack.c.l.b16 %v1094
          %v1127 = vunpack.c.l.b16 %v1095
          %v1128 = vunpack.c.l.b16 %v1096
          %v1129 = vunpack.c.l.b16 %v1097
          %v1130 = vunpack.c.l.b16 %v1098
          %v1131 = vpack.c.b16 %v1116, %v1115
          %v1132 = vpack.c.b16 %v1118, %v1117
          %v1133 = vpack.c.b16 %v1120, %v1119
          %v1134 = vpack.c.b16 %v1122, %v1121
          %v1135 = vpack.c.b16 %v1124, %v1123
          %v1136 = vpack.c.b16 %v1126, %v1125
          %v1137 = vpack.c.b16 %v1128, %v1127
          %v1138 = vpack.c.b16 %v1130, %v1129
          %1147 = vmatprep.subr.bf16.mxu0 0
          %1148 = vmatpush1.bf16.msra.mxu0 %v1131
          %1149 = vmatprep.subr.bf16.mxu0 0
          %1150 = vmatpush1.bf16.msra.mxu0 %v1132
          %1151 = vmatprep.subr.bf16.mxu0 0
          %1152 = vmatpush1.bf16.msra.mxu0 %v1133
          %1153 = vmatprep.subr.bf16.mxu0 0
          %1154 = vmatpush1.bf16.msra.mxu0 %v1134
          %1155 = vmatprep.subr.bf16.mxu0 0
          %1156 = vmatpush1.bf16.msra.mxu0 %v1135
          %1157 = vmatprep.subr.bf16.mxu0 0
          %1158 = vmatpush1.bf16.msra.mxu0 %v1136
          %1159 = vmatprep.subr.bf16.mxu0 0
          %1160 = vmatpush1.bf16.msra.mxu0 %v1137
          %1161 = vmatprep.subr.bf16.mxu0 0
          %1162 = vmatpush1.bf16.msra.mxu0 %v1138
          %1163 = vmatprep.subr.bf16.mxu0 0
          %1164 = vmatpush1.bf16.msra.mxu0 0
          %1165 = vmatprep.subr.bf16.mxu0 0
          %1166 = vmatpush1.bf16.msra.mxu0 0
          %1167 = vmatprep.subr.bf16.mxu0 0
          %1168 = vmatpush1.bf16.msra.mxu0 0
          %1169 = vmatprep.subr.bf16.mxu0 0
          %1170 = vmatpush1.bf16.msra.mxu0 0
          %1171 = vmatprep.subr.bf16.mxu0 0
          %1172 = vmatpush1.bf16.msra.mxu0 0
          %1173 = vmatprep.subr.bf16.mxu0 0
          %1174 = vmatpush1.bf16.msra.mxu0 0
          %1175 = vmatprep.subr.bf16.mxu0 0
          %1176 = vmatpush1.bf16.msra.mxu0 0
          %1177 = vmatprep.subr.bf16.mxu0 0
          %1178 = vmatpush1.bf16.msra.mxu0 0
          %1179 = vmatprep.mubr.bf16.mxu0 0
          %1180 = vmatmul.mubr.bf16.gmra.mrb[0].mxu0 %v1081
          %v1181 = vpop.f32.mrb[0].mxu0
          %v1182 = vadd.f32 0.0, %v1181
          %v1183 = vpop.f32.mrb[0].mxu0
          %v1184 = vpop.f32.mrb[0].mxu0
          %v1185 = vadd.f32 0.0, %v1184
          %v1186 = vpop.f32.mrb[0].mxu0
          %1187 = vdwg.mxu0
          %v1188 = vadd.f32 %v1077, %v1182
          %v1189 = vadd.f32 %v1078, %v1185
          %v1190 = vxor.u32 %v1188, 2147483648
          %v1191 = vxor.u32 %v1189, 2147483648
          %v1192 = vmul.f32 %v1190, 1.442695
          %v1193 = vpow.pop %v1192
          %v1194 = vmul.f32 %v1191, 1.442695
          %v1195 = vpow.pop %v1194
          %v1196 = vadd.f32 %v1193, 1.0
          %v1197 = vadd.f32 %v1195, 1.0
          %v1198 = vrcp.pop %v1196
          %v1199 = vmul.f32 1.0, %v1198
          %v1200 = vrcp.pop %v1197
          %v1201 = vmul.f32 1.0, %v1200
          %vm1202 = vcmask 130048
          %1203 = vst.msk [vmem:[%s190] sm:$0xff] %vm1202, %v1199
          %1204 = vst.msk [vmem:[%s190 + $0x8] sm:$0xff] %vm1202, %v1201
        $region48: #{tpu_custom_call.1} parent=27 // pred_fallthru
          _
        %s1205 = sand.u32 %s89, 1
        %s1206 = scalar_lea.sflag [#allocation6], %s1205
        %s1207 = sand.u32 %s89, 1
        %s1208 = smul.addr %s1207, 16
        %s1209 = scalar_lea.vmem [#allocation9], %s1208
        // Predicated region
        $region49: #{tpu_custom_call.1} parent=27 // pred_check
          %p1210 = pneg %p99
        $region50: #{tpu_custom_call.1} parent=27 // pred_check_branch
          %1212 = sbr.rel (%p1210) target = $region52
        $region51: #{tpu_custom_call.1} parent=27 // pred_region
          %s1214 = ssub.s32 256, 256
          %1215 = vsyncadd %s1206, %s1214
          %s1216 = smul.addr %s24, 2
          %s1217 = smul.addr %s1216, 128
          %s1218 = scalar_lea.hbm %s2, %s1217
          %s1219 = sshll.u32 %s1209, 4
          %s1220 = int_to_ptr.vmem [resolvable:$true] %s1219
          %1225 = dma.vmem_to_hbm [thread:$0]  %s1220, 256, %s1218, %s1206, 128, 128, 8
        $region52: #{tpu_custom_call.1} parent=27 // pred_fallthru
          _
      $region28: #{tpu_custom_call.1} parent=5 // pred_fallthru
        _
      %p1226 = scmp.le.s32.totalorder 2, %s15
      // Predicated region
      $region53: #{tpu_custom_call.1} parent=5 // pred_check
        %p1227 = pneg %p1226
      $region54: #{tpu_custom_call.1} parent=5 // pred_check_branch
        %1229 = sbr.rel (%p1227) target = $region56
      $region55: #{tpu_custom_call.1} parent=5 // pred_region
        %s1230 = ssub.s32 %s15, 2
        // Predicated region
        $region57: #{tpu_custom_call.1} parent=55 // pred_check
          %p1231 = pneg %p105
        $region58: #{tpu_custom_call.1} parent=55 // pred_check_branch
          %1233 = sbr.rel (%p1231) target = $region60
        $region59: #{tpu_custom_call.1} parent=55 // pred_region
          %s1234 = sand.u32 %s90, 1
          %s1235 = scalar_lea.sflag [#allocation6], %s1234
          %s1236 = sand.u32 %s90, 1
          %s1237 = smul.addr %s1236, 16
          %s1238 = scalar_lea.vmem [#allocation9], %s1237
          %1239 = dma.done %s1235, 256
        $region60: #{tpu_custom_call.1} parent=55 // pred_fallthru
          _
      $region56: #{tpu_custom_call.1} parent=5 // pred_fallthru
        _
    $region6: #{tpu_custom_call.1} parent=1 // loop_footer
      %s19 = sadd.s32 1, %s15
    $region7: #{tpu_custom_call.1} parent=1 // loop_footer_branch
      %14 = sbr.rel target = $region3
    $region8: #{tpu_custom_call.1} parent=1 // loop_exit
      _
    %1240 = vsyncpa [#allocation5], 1
    %s1241 = scalar_lea.sflag [#allocation5], 1
    %1242 = vsyncpa %s1241, 1
    %1243 = vsyncpa [#allocation8], 1
    %1244 = vsyncpa [#allocation6], 1
    %s1245 = scalar_lea.sflag [#allocation6], 1
    %1246 = vsyncpa %s1245, 1

</llo_original>
